<compile_context>
chip_gen: v6e
topology: v6e:2x2x1
jax: 0.10.0
libtpu: 0.0.40
codegen_flags: <defaults>
</compile_context>

<pallas_src>
import functools

import jax
import jax.numpy as jnp
from jax.experimental import pallas as pl
from jax.experimental.pallas import tpu as pltpu

K = 7     # conv kernel size (module hard-codes 7 regardless of __init__ arg)
PAD = 3   # conv padding


# --------------------------------------------------------------------------
# Generation-aware VMEM budgets.
# --------------------------------------------------------------------------
def _vmem_budgets():
    try:
        cap = int(pltpu.get_tpu_info().vmem_capacity_bytes)
    except Exception:
        cap = 64 * 1024 * 1024            # conservative: v7x per-TC VMEM
    vmem_limit = min((cap * 3) // 4, 100 * 1024 * 1024)   # 96 MiB v5e/v6e, 48 MiB v7x
    block_budget = vmem_limit // 3        # double-buffered input + accumulators + slack
    return block_budget, vmem_limit


def _pick_tiles(n, c, hw, itemsize, budget):
    """Returns (nb, tc, thw) for the channel-reduction kernel."""
    packing = max(1, 32 // itemsize)      # sublane packing: 8 f32 / 16 bf16 / 32 int8

    # HW (lane) tile: full H*W unless even a minimum-height slab blows the budget.
    thw = hw
    if packing * hw * itemsize > budget and hw % 128 == 0:
        max_thw = max(128, (budget // (packing * itemsize)) // 128 * 128)
        divs = [d for d in range(128, hw + 1, 128) if hw % d == 0 and d <= max_thw]
        if divs:
            thw = max(divs)

    # Channel (sublane) tile: full C if it fits, else packing-aligned (tail masked).
    per_channel = thw * itemsize
    max_c = max(1, budget // per_channel)
    if c <= max_c:
        tc = c
    else:
        tc = max(packing, (max_c // packing) * packing)

    # Batch tile: fill the remaining budget; keep >= 2 parallel grid steps
    # (two-TensorCore chips) when the HW axis is not tiled.
    per_sample = tc * thw * itemsize
    max_nb = max(1, budget // per_sample)
    if thw == hw and n >= 2:
        max_nb = max(1, min(max_nb, n // 2))
    max_nb = min(max_nb, n)
    nb = next(d for d in range(max_nb, 0, -1) if n % d == 0)
    return nb, tc, thw


def _pick_conv_batch(n, h, w, itemsize, budget):
    """Samples per kernel-2 grid step (stacked along the matmul M dimension)."""
    toep_bytes = 2 * K * (2 * w) * w * 4                        # double-buffered
    per_sample = (2 * 2 * h * w * 4                             # avg+max, 2-buffered
                  + (h + 2 * PAD) * 2 * w * 4                   # pad scratch
                  + 2 * h * w * itemsize)                       # output, 2-buffered
    avail = max(per_sample, budget - toep_bytes)
    max_nb = max(1, avail // per_sample)
    target = max(1, -(-256 // h))                               # aim for M >= 256
    nb2 = max(1, min(n, target, max_nb))
    return next(d for d in range(nb2, 0, -1) if n % d == 0)


# --------------------------------------------------------------------------
# Kernel 1: channel mean / max, lane-dense, accumulated in the output refs.
# --------------------------------------------------------------------------
def _channel_reduce_kernel(x_ref, avg_ref, max_ref, *, inv_c, c_total, tc, need_mask):
    """x_ref: (NB, TC, THW) input dtype; avg_ref/max_ref: (NB, 1, THW) f32."""
    k = pl.program_id(2)

    @pl.when(k == 0)
    def _():
        avg_ref[...] = jnp.zeros_like(avg_ref)
        max_ref[...] = jnp.full_like(max_ref, -jnp.inf)

    xb = x_ref[...]                                         # (NB, TC, THW)
    if need_mask:
        ch = k * tc + jax.lax.broadcasted_iota(jnp.int32, xb.shape, 1)
        valid = ch < c_total
        x_sum = jnp.where(valid, xb, jnp.zeros_like(xb))
        x_max = jnp.where(valid, xb, jnp.full_like(xb, -jnp.inf))
    else:
        x_sum = x_max = xb

    avg_ref[...] += jnp.sum(x_sum, axis=1, keepdims=True, dtype=jnp.float32)
    max_ref[...] = jnp.maximum(
        max_ref[...], jnp.max(x_max, axis=1, keepdims=True).astype(jnp.float32))

    @pl.when(k == pl.num_programs(2) - 1)
    def _():
        avg_ref[...] *= inv_c


# --------------------------------------------------------------------------
# Kernel 2: fused 7x7 conv (7 banded-Toeplitz MXU matmuls, 2W contraction) + sigmoid.
# --------------------------------------------------------------------------
def _conv_sigmoid_kernel(t_ref, avg_ref, max_ref, o_ref, pad_sc, *, nb, h, w):
    """t_ref: (K, 2W, W) f32 (resident); avg/max_ref: (NB2, H, W) f32;
    o_ref: (NB2, 1, H, W); pad_sc: (NB2, H+2*PAD, 2W) f32."""
    # Zero only the vertical-padding rows (cheap, and safe even when the batch
    # grid axis is sharded across TensorCores, so no reliance on program_id==0).
    pad_sc[:, 0:PAD, :] = jnp.zeros((nb, PAD, 2 * w), jnp.float32)
    pad_sc[:, PAD + h:PAD + h + PAD, :] = jnp.zeros((nb, PAD, 2 * w), jnp.float32)

    # Interior rows: avg in lanes [0, W), max in lanes [W, 2W).
    pad_sc[:, PAD:PAD + h, 0:w] = avg_ref[...]
    pad_sc[:, PAD:PAD + h, w:2 * w] = max_ref[...]

    acc = jnp.zeros((nb * h, w), jnp.float32)
    for kh in range(K):                     # 7 MXU matmuls, contraction depth 2W
        lhs = pad_sc[:, kh:kh + h, :].reshape(nb * h, 2 * w)
        acc = acc + jnp.dot(lhs, t_ref[kh], preferred_element_type=jnp.float32)

    o_ref[...] = jax.nn.sigmoid(acc).astype(o_ref.dtype).reshape(nb, 1, h, w)


def _build_toeplitz(conv_weight, w):
    """T[kh] is (2W, W): rows [0, W) carry the avg-channel taps, rows [W, 2W)
    the max-channel taps, so conv_out[h, :] = sum_kh [avg_vpad[h+kh,:] | max_vpad[h+kh,:]] @ T[kh]
    with horizontal 'same' padding realised by band truncation and vertical
    padding by the zero rows of the padded scratch."""
    wgt = conv_weight.reshape(2, K, K).astype(jnp.float32)       # (ci, kh, kw)
    j = jnp.arange(w)[:, None]          # input column (contraction index)
    col = jnp.arange(w)[None, :]        # output column
    kw_idx = j - col + PAD              # (W, W)
    valid = (kw_idx >= 0) & (kw_idx < K)
    kw_c = jnp.clip(kw_idx, 0, K - 1)
    t = jnp.where(valid[None, None], wgt[:, :, kw_c], 0.0)       # (2, K, W, W)
    return jnp.transpose(t, (1, 0, 2, 3)).reshape(K, 2 * w, w)   # (K, 2W, W)


# --------------------------------------------------------------------------
# Wrapper
# --------------------------------------------------------------------------
@jax.jit
def spatial_attention(x, conv_weight):
    """x: (N, C, H, W), conv_weight: (1, 2, 7, 7)  ->  (N, 1, H, W)."""
    n, c, h, w = x.shape
    hw = h * w
    block_budget, vmem_limit = _vmem_budgets()
    nb, tc, thw = _pick_tiles(n, c, hw, x.dtype.itemsize, block_budget)
    need_mask = (c % tc) != 0

    # ---- kernel 1: lane-dense channel reduction -> avg / max feature maps ----
    x_flat = x.reshape(n, c, hw)          # metadata-only for contiguous NCHW
    avg_flat, max_flat = pl.pallas_call(
        functools.partial(_channel_reduce_kernel, inv_c=1.0 / c, c_total=c,
                          tc=tc, need_mask=need_mask),
        out_shape=(jax.ShapeDtypeStruct((n, 1, hw), jnp.float32),
                   jax.ShapeDtypeStruct((n, 1, hw), jnp.float32)),
        grid=(n // nb, hw // thw, pl.cdiv(c, tc)),
        in_specs=[pl.BlockSpec((nb, tc, thw), lambda i, j, k: (i, k, j))],
        out_specs=(pl.BlockSpec((nb, 1, thw), lambda i, j, k: (i, 0, j)),
                   pl.BlockSpec((nb, 1, thw), lambda i, j, k: (i, 0, j))),
        compiler_params=pltpu.CompilerParams(
            dimension_semantics=("parallel", "parallel", "arbitrary"),
            vmem_limit_bytes=vmem_limit),
    )(x_flat)

    # ---- kernel 2: batched 7-matmul Toeplitz conv + sigmoid ------------------
    toeplitz = _build_toeplitz(conv_weight, w)            # (K, 2W, W) f32
    nb2 = _pick_conv_batch(n, h, w, x.dtype.itemsize, block_budget)
    avg_f = avg_flat.reshape(n, h, w)                     # tiny, metadata-only
    max_f = max_flat.reshape(n, h, w)
    out = pl.pallas_call(
        functools.partial(_conv_sigmoid_kernel, nb=nb2, h=h, w=w),
        out_shape=jax.ShapeDtypeStruct((n, 1, h, w), x.dtype),
        grid=(n // nb2,),
        in_specs=[pl.BlockSpec((K, 2 * w, w), lambda i: (0, 0, 0)),   # resident
                  pl.BlockSpec((nb2, h, w), lambda i: (i, 0, 0)),
                  pl.BlockSpec((nb2, h, w), lambda i: (i, 0, 0))],
        out_specs=pl.BlockSpec((nb2, 1, h, w), lambda i: (i, 0, 0, 0)),
        scratch_shapes=[pltpu.VMEM((nb2, h + 2 * PAD, 2 * w), jnp.float32)],
        compiler_params=pltpu.CompilerParams(
            dimension_semantics=("parallel",),
            vmem_limit_bytes=vmem_limit),
    )(toeplitz, avg_f, max_f)
    return out


def spatial_attention_reference(x, conv_weight):
    """Pure-JAX reference for correctness checking."""
    avg = jnp.mean(x, axis=1, keepdims=True)
    mx = jnp.max(x, axis=1, keepdims=True)
    feat = jnp.concatenate([avg, mx], axis=1)
    out = jax.lax.conv_general_dilated(
        feat, conv_weight, window_strides=(1, 1),
        padding=((PAD, PAD), (PAD, PAD)),
        dimension_numbers=("NCHW", "OIHW", "NCHW"),
        precision=jax.lax.Precision.HIGHEST)
    return jax.nn.sigmoid(out)


if __name__ == "__main__":
    key = jax.random.PRNGKey(0)
    kx, kw = jax.random.split(key)

    N, C, H, W = 2, 4, 16, 16
    x = jax.random.normal(kx, (N, C, H, W), dtype=jnp.float32)
    # Deterministic synthetic Conv2d(2, 1, kernel_size=7, bias=False) weight.
    conv_weight = jax.random.normal(kw, (1, 2, K, K), dtype=jnp.float32) * 0.05

    out = jax.block_until_ready(spatial_attention(x, conv_weight))
    ref = spatial_attention_reference(x, conv_weight)

    assert out.shape == (N, 1, H, W), out.shape
    # Tolerance leaves headroom in case the MXU evaluates the f32 Toeplitz
    # matmuls with bf16 passes at default matmul precision; with full-f32
    # matmuls the observed error is ~1e-6.
    err = float(jnp.max(jnp.abs(out.astype(jnp.float32) - ref)))
    assert err < 2e-3, err

    print("KERNEL_OK")
</pallas_src>

<mosaic_0001>
module attributes {stable_mosaic.version = 11 : i64} {
  func.func @_channel_reduce_kernel(%arg0: i32, %arg1: i32, %arg2: i32, %arg3: memref<1x4x256xf32, #tpu.memory_space<vmem>>, %arg4: memref<1x1x256xf32, #tpu.memory_space<vmem>>, %arg5: memref<1x1x256xf32, #tpu.memory_space<vmem>>) attributes {dimension_semantics = [#tpu.dimension_semantics<parallel>, #tpu.dimension_semantics<parallel>, #tpu.dimension_semantics<arbitrary>], iteration_bounds = array<i64: 2, 1, 1>, scalar_prefetch = 0 : i64, scratch_operands = 0 : i64, tpu.core_type = #tpu.core_type<tc>, window_params = [{transform_indices = @transform_0, window_bounds = array<i64: 1, 4, 256>}, {transform_indices = @transform_1, window_bounds = array<i64: 1, 1, 256>}, {transform_indices = @transform_2, window_bounds = array<i64: 1, 1, 256>}]} {
    %c0_i32 = arith.constant 0 : i32
    %0 = arith.cmpi eq, %arg2, %c0_i32 : i32
    %1 = arith.extui %0 : i1 to i32
    %c0_i32_0 = arith.constant 0 : i32
    %2 = arith.cmpi ne, %1, %c0_i32_0 : i32
    scf.if %2 {
      %cst_18 = arith.constant 0.000000e+00 : f32
      %17 = vector.broadcast %cst_18 : f32 to vector<1x1x256xf32>
      %c0_19 = arith.constant 0 : index
      %c0_20 = arith.constant 0 : index
      %c0_21 = arith.constant 0 : index
      %18 = vector.load %arg4[%c0_19, %c0_20, %c0_21] : memref<1x1x256xf32, #tpu.memory_space<vmem>>, vector<1x1x256xf32>
      tpu.vector_store %arg4[%c0_19, %c0_20, %c0_21], %17 {strides = array<i32>} : memref<1x1x256xf32, #tpu.memory_space<vmem>>, vector<1x1x256xf32>,
      %cst_22 = arith.constant 0xFF800000 : f32
      %19 = vector.broadcast %cst_22 : f32 to vector<1x1x256xf32>
      %c0_23 = arith.constant 0 : index
      %c0_24 = arith.constant 0 : index
      %c0_25 = arith.constant 0 : index
      %20 = vector.load %arg5[%c0_23, %c0_24, %c0_25] : memref<1x1x256xf32, #tpu.memory_space<vmem>>, vector<1x1x256xf32>
      tpu.vector_store %arg5[%c0_23, %c0_24, %c0_25], %19 {strides = array<i32>} : memref<1x1x256xf32, #tpu.memory_space<vmem>>, vector<1x1x256xf32>,
    } else {
    }
    %c0 = arith.constant 0 : index
    %c0_1 = arith.constant 0 : index
    %c0_2 = arith.constant 0 : index
    %3 = vector.load %arg3[%c0, %c0_1, %c0_2] : memref<1x4x256xf32, #tpu.memory_space<vmem>>, vector<1x4x256xf32>
    %c0_3 = arith.constant 0 : index
    %c0_4 = arith.constant 0 : index
    %c0_5 = arith.constant 0 : index
    %4 = vector.load %arg4[%c0_3, %c0_4, %c0_5] : memref<1x1x256xf32, #tpu.memory_space<vmem>>, vector<1x1x256xf32>
    %cst = arith.constant dense<0.000000e+00> : vector<1x256xf32>
    %5 = vector.multi_reduction <add>, %3, %cst [1] : vector<1x4x256xf32> to vector<1x256xf32>
    %6 = vector.shape_cast %5 : vector<1x256xf32> to vector<1x1x256xf32>
    %7 = arith.addf %4, %6 : vector<1x1x256xf32>
    %c0_6 = arith.constant 0 : index
    %c0_7 = arith.constant 0 : index
    %c0_8 = arith.constant 0 : index
    %8 = vector.load %arg4[%c0_6, %c0_7, %c0_8] : memref<1x1x256xf32, #tpu.memory_space<vmem>>, vector<1x1x256xf32>
    tpu.vector_store %arg4[%c0_6, %c0_7, %c0_8], %7 {strides = array<i32>} : memref<1x1x256xf32, #tpu.memory_space<vmem>>, vector<1x1x256xf32>,
    %c0_9 = arith.constant 0 : index
    %c0_10 = arith.constant 0 : index
    %c0_11 = arith.constant 0 : index
    %9 = vector.load %arg5[%c0_9, %c0_10, %c0_11] : memref<1x1x256xf32, #tpu.memory_space<vmem>>, vector<1x1x256xf32>
    %cst_12 = arith.constant dense<0xFF800000> : vector<1x256xf32>
    %10 = vector.multi_reduction <maximumf>, %3, %cst_12 [1] : vector<1x4x256xf32> to vector<1x256xf32>
    %11 = vector.shape_cast %10 : vector<1x256xf32> to vector<1x1x256xf32>
    %12 = arith.maximumf %9, %11 : vector<1x1x256xf32>
    %c0_13 = arith.constant 0 : index
    %c0_14 = arith.constant 0 : index
    %c0_15 = arith.constant 0 : index
    %13 = vector.load %arg5[%c0_13, %c0_14, %c0_15] : memref<1x1x256xf32, #tpu.memory_space<vmem>>, vector<1x1x256xf32>
    tpu.vector_store %arg5[%c0_13, %c0_14, %c0_15], %12 {strides = array<i32>} : memref<1x1x256xf32, #tpu.memory_space<vmem>>, vector<1x1x256xf32>,
    %c0_i32_16 = arith.constant 0 : i32
    %14 = arith.cmpi eq, %arg2, %c0_i32_16 : i32
    %15 = arith.extui %14 : i1 to i32
    %c0_i32_17 = arith.constant 0 : i32
    %16 = arith.cmpi ne, %15, %c0_i32_17 : i32
    scf.if %16 {
      %c0_18 = arith.constant 0 : index
      %c0_19 = arith.constant 0 : index
      %c0_20 = arith.constant 0 : index
      %17 = vector.load %arg4[%c0_18, %c0_19, %c0_20] : memref<1x1x256xf32, #tpu.memory_space<vmem>>, vector<1x1x256xf32>
      %cst_21 = arith.constant 2.500000e-01 : f32
      %18 = vector.broadcast %cst_21 : f32 to vector<1x1x256xf32>
      %19 = arith.mulf %17, %18 : vector<1x1x256xf32>
      %c0_22 = arith.constant 0 : index
      %c0_23 = arith.constant 0 : index
      %c0_24 = arith.constant 0 : index
      %20 = vector.load %arg4[%c0_22, %c0_23, %c0_24] : memref<1x1x256xf32, #tpu.memory_space<vmem>>, vector<1x1x256xf32>
      tpu.vector_store %arg4[%c0_22, %c0_23, %c0_24], %19 {strides = array<i32>} : memref<1x1x256xf32, #tpu.memory_space<vmem>>, vector<1x1x256xf32>,
    } else {
    }
    return
  }
  func.func @transform_0(%arg0: i32, %arg1: i32, %arg2: i32) -> (i32, i32, i32) {
    %c0_i32 = arith.constant 0 : i32
    return %arg0, %arg2, %arg1 : i32, i32, i32
  }
  func.func @transform_1(%arg0: i32, %arg1: i32, %arg2: i32) -> (i32, i32, i32) {
    %c0_i32 = arith.constant 0 : i32
    %c0_i32_0 = arith.constant 0 : i32
    return %arg0, %c0_i32, %arg1 : i32, i32, i32
  }
  func.func @transform_2(%arg0: i32, %arg1: i32, %arg2: i32) -> (i32, i32, i32) {
    %c0_i32 = arith.constant 0 : i32
    %c0_i32_0 = arith.constant 0 : i32
    return %arg0, %c0_i32, %arg1 : i32, i32, i32
  }
}

module attributes {stable_mosaic.version = 11 : i64} {
  func.func @_conv_sigmoid_kernel(%arg0: i32, %arg1: memref<7x32x16xf32, #tpu.memory_space<vmem>>, %arg2: memref<2x16x16xf32, #tpu.memory_space<vmem>>, %arg3: memref<2x16x16xf32, #tpu.memory_space<vmem>>, %arg4: memref<2x1x16x16xf32, #tpu.memory_space<vmem>>, %arg5: memref<2x22x32xf32, #tpu.memory_space<vmem>>) attributes {dimension_semantics = [#tpu.dimension_semantics<parallel>], iteration_bounds = array<i64: 1>, scalar_prefetch = 0 : i64, scratch_operands = 1 : i64, tpu.core_type = #tpu.core_type<tc>, window_params = [{pipeline_mode = #tpu.pipeline_mode<synchronous>, transform_indices = @transform_0, window_bounds = array<i64: 7, 32, 16>}, {transform_indices = @transform_1, window_bounds = array<i64: 2, 16, 16>}, {transform_indices = @transform_2, window_bounds = array<i64: 2, 16, 16>}, {transform_indices = @transform_3, window_bounds = array<i64: 2, 1, 16, 16>}]} {
    %cst = arith.constant 0.000000e+00 : f32
    %0 = vector.broadcast %cst : f32 to vector<2x3x32xf32>
    %c0 = arith.constant 0 : index
    %c0_0 = arith.constant 0 : index
    %c0_1 = arith.constant 0 : index
    %1 = vector.load %arg5[%c0, %c0_0, %c0_1] : memref<2x22x32xf32, #tpu.memory_space<vmem>>, vector<2x3x32xf32>
    tpu.vector_store %arg5[%c0, %c0_0, %c0_1], %0 {strides = array<i32>} : memref<2x22x32xf32, #tpu.memory_space<vmem>>, vector<2x3x32xf32>,
    %cst_2 = arith.constant 0.000000e+00 : f32
    %2 = vector.broadcast %cst_2 : f32 to vector<2x3x32xf32>
    %c0_3 = arith.constant 0 : index
    %c19 = arith.constant 19 : index
    %c0_4 = arith.constant 0 : index
    %3 = vector.load %arg5[%c0_3, %c19, %c0_4] : memref<2x22x32xf32, #tpu.memory_space<vmem>>, vector<2x3x32xf32>
    tpu.vector_store %arg5[%c0_3, %c19, %c0_4], %2 {strides = array<i32>} : memref<2x22x32xf32, #tpu.memory_space<vmem>>, vector<2x3x32xf32>,
    %c0_5 = arith.constant 0 : index
    %c0_6 = arith.constant 0 : index
    %c0_7 = arith.constant 0 : index
    %4 = vector.load %arg2[%c0_5, %c0_6, %c0_7] : memref<2x16x16xf32, #tpu.memory_space<vmem>>, vector<2x16x16xf32>
    %c0_8 = arith.constant 0 : index
    %c3 = arith.constant 3 : index
    %c0_9 = arith.constant 0 : index
    %5 = vector.load %arg5[%c0_8, %c3, %c0_9] : memref<2x22x32xf32, #tpu.memory_space<vmem>>, vector<2x16x16xf32>
    tpu.vector_store %arg5[%c0_8, %c3, %c0_9], %4 {strides = array<i32>} : memref<2x22x32xf32, #tpu.memory_space<vmem>>, vector<2x16x16xf32>,
    %c0_10 = arith.constant 0 : index
    %c0_11 = arith.constant 0 : index
    %c0_12 = arith.constant 0 : index
    %6 = vector.load %arg3[%c0_10, %c0_11, %c0_12] : memref<2x16x16xf32, #tpu.memory_space<vmem>>, vector<2x16x16xf32>
    %c0_13 = arith.constant 0 : index
    %c3_14 = arith.constant 3 : index
    %c16 = arith.constant 16 : index
    %7 = vector.load %arg5[%c0_13, %c3_14, %c16] : memref<2x22x32xf32, #tpu.memory_space<vmem>>, vector<2x16x16xf32>
    tpu.vector_store %arg5[%c0_13, %c3_14, %c16], %6 {strides = array<i32>} : memref<2x22x32xf32, #tpu.memory_space<vmem>>, vector<2x16x16xf32>,
    %cst_15 = arith.constant 0.000000e+00 : f32
    %8 = vector.broadcast %cst_15 : f32 to vector<32x16xf32>
    %c0_16 = arith.constant 0 : index
    %c0_17 = arith.constant 0 : index
    %c0_18 = arith.constant 0 : index
    %9 = vector.load %arg5[%c0_16, %c0_17, %c0_18] : memref<2x22x32xf32, #tpu.memory_space<vmem>>, vector<2x16x32xf32>
    %10 = vector.shape_cast %9 : vector<2x16x32xf32> to vector<32x32xf32>
    %c0_19 = arith.constant 0 : index
    %c0_20 = arith.constant 0 : index
    %c0_21 = arith.constant 0 : index
    %11 = vector.load %arg1[%c0_19, %c0_20, %c0_21] : memref<7x32x16xf32, #tpu.memory_space<vmem>>, vector<1x32x16xf32>
    %12 = vector.shape_cast %11 : vector<1x32x16xf32> to vector<32x16xf32>
    %cst_22 = arith.constant dense<0.000000e+00> : vector<32x16xf32>
    %13 = tpu.matmul %10, %12, %cst_22 {dimension_numbers = #tpu.dot_dimension_numbers<[1], [0], [0], [1], [0, 0, 1, 1], [], []>} : vector<32x32xf32>, vector<32x16xf32>, vector<32x16xf32> -> vector<32x16xf32>
    %14 = arith.addf %8, %13 : vector<32x16xf32>
    %c0_23 = arith.constant 0 : index
    %c1 = arith.constant 1 : index
    %c0_24 = arith.constant 0 : index
    %15 = vector.load %arg5[%c0_23, %c1, %c0_24] : memref<2x22x32xf32, #tpu.memory_space<vmem>>, vector<2x16x32xf32>
    %16 = vector.shape_cast %15 : vector<2x16x32xf32> to vector<32x32xf32>
    %c1_25 = arith.constant 1 : index
    %c0_26 = arith.constant 0 : index
    %c0_27 = arith.constant 0 : index
    %17 = vector.load %arg1[%c1_25, %c0_26, %c0_27] : memref<7x32x16xf32, #tpu.memory_space<vmem>>, vector<1x32x16xf32>
    %18 = vector.shape_cast %17 : vector<1x32x16xf32> to vector<32x16xf32>
    %cst_28 = arith.constant dense<0.000000e+00> : vector<32x16xf32>
    %19 = tpu.matmul %16, %18, %cst_28 {dimension_numbers = #tpu.dot_dimension_numbers<[1], [0], [0], [1], [0, 0, 1, 1], [], []>} : vector<32x32xf32>, vector<32x16xf32>, vector<32x16xf32> -> vector<32x16xf32>
    %20 = arith.addf %14, %19 : vector<32x16xf32>
    %c0_29 = arith.constant 0 : index
    %c2 = arith.constant 2 : index
    %c0_30 = arith.constant 0 : index
    %21 = vector.load %arg5[%c0_29, %c2, %c0_30] : memref<2x22x32xf32, #tpu.memory_space<vmem>>, vector<2x16x32xf32>
    %22 = vector.shape_cast %21 : vector<2x16x32xf32> to vector<32x32xf32>
    %c2_31 = arith.constant 2 : index
    %c0_32 = arith.constant 0 : index
    %c0_33 = arith.constant 0 : index
    %23 = vector.load %arg1[%c2_31, %c0_32, %c0_33] : memref<7x32x16xf32, #tpu.memory_space<vmem>>, vector<1x32x16xf32>
    %24 = vector.shape_cast %23 : vector<1x32x16xf32> to vector<32x16xf32>
    %cst_34 = arith.constant dense<0.000000e+00> : vector<32x16xf32>
    %25 = tpu.matmul %22, %24, %cst_34 {dimension_numbers = #tpu.dot_dimension_numbers<[1], [0], [0], [1], [0, 0, 1, 1], [], []>} : vector<32x32xf32>, vector<32x16xf32>, vector<32x16xf32> -> vector<32x16xf32>
    %26 = arith.addf %20, %25 : vector<32x16xf32>
    %c0_35 = arith.constant 0 : index
    %c3_36 = arith.constant 3 : index
    %c0_37 = arith.constant 0 : index
    %27 = vector.load %arg5[%c0_35, %c3_36, %c0_37] : memref<2x22x32xf32, #tpu.memory_space<vmem>>, vector<2x16x32xf32>
    %28 = vector.shape_cast %27 : vector<2x16x32xf32> to vector<32x32xf32>
    %c3_38 = arith.constant 3 : index
    %c0_39 = arith.constant 0 : index
    %c0_40 = arith.constant 0 : index
    %29 = vector.load %arg1[%c3_38, %c0_39, %c0_40] : memref<7x32x16xf32, #tpu.memory_space<vmem>>, vector<1x32x16xf32>
    %30 = vector.shape_cast %29 : vector<1x32x16xf32> to vector<32x16xf32>
    %cst_41 = arith.constant dense<0.000000e+00> : vector<32x16xf32>
    %31 = tpu.matmul %28, %30, %cst_41 {dimension_numbers = #tpu.dot_dimension_numbers<[1], [0], [0], [1], [0, 0, 1, 1], [], []>} : vector<32x32xf32>, vector<32x16xf32>, vector<32x16xf32> -> vector<32x16xf32>
    %32 = arith.addf %26, %31 : vector<32x16xf32>
    %c0_42 = arith.constant 0 : index
    %c4 = arith.constant 4 : index
    %c0_43 = arith.constant 0 : index
    %33 = vector.load %arg5[%c0_42, %c4, %c0_43] : memref<2x22x32xf32, #tpu.memory_space<vmem>>, vector<2x16x32xf32>
    %34 = vector.shape_cast %33 : vector<2x16x32xf32> to vector<32x32xf32>
    %c4_44 = arith.constant 4 : index
    %c0_45 = arith.constant 0 : index
    %c0_46 = arith.constant 0 : index
    %35 = vector.load %arg1[%c4_44, %c0_45, %c0_46] : memref<7x32x16xf32, #tpu.memory_space<vmem>>, vector<1x32x16xf32>
    %36 = vector.shape_cast %35 : vector<1x32x16xf32> to vector<32x16xf32>
    %cst_47 = arith.constant dense<0.000000e+00> : vector<32x16xf32>
    %37 = tpu.matmul %34, %36, %cst_47 {dimension_numbers = #tpu.dot_dimension_numbers<[1], [0], [0], [1], [0, 0, 1, 1], [], []>} : vector<32x32xf32>, vector<32x16xf32>, vector<32x16xf32> -> vector<32x16xf32>
    %38 = arith.addf %32, %37 : vector<32x16xf32>
    %c0_48 = arith.constant 0 : index
    %c5 = arith.constant 5 : index
    %c0_49 = arith.constant 0 : index
    %39 = vector.load %arg5[%c0_48, %c5, %c0_49] : memref<2x22x32xf32, #tpu.memory_space<vmem>>, vector<2x16x32xf32>
    %40 = vector.shape_cast %39 : vector<2x16x32xf32> to vector<32x32xf32>
    %c5_50 = arith.constant 5 : index
    %c0_51 = arith.constant 0 : index
    %c0_52 = arith.constant 0 : index
    %41 = vector.load %arg1[%c5_50, %c0_51, %c0_52] : memref<7x32x16xf32, #tpu.memory_space<vmem>>, vector<1x32x16xf32>
    %42 = vector.shape_cast %41 : vector<1x32x16xf32> to vector<32x16xf32>
    %cst_53 = arith.constant dense<0.000000e+00> : vector<32x16xf32>
    %43 = tpu.matmul %40, %42, %cst_53 {dimension_numbers = #tpu.dot_dimension_numbers<[1], [0], [0], [1], [0, 0, 1, 1], [], []>} : vector<32x32xf32>, vector<32x16xf32>, vector<32x16xf32> -> vector<32x16xf32>
    %44 = arith.addf %38, %43 : vector<32x16xf32>
    %c0_54 = arith.constant 0 : index
    %c6 = arith.constant 6 : index
    %c0_55 = arith.constant 0 : index
    %45 = vector.load %arg5[%c0_54, %c6, %c0_55] : memref<2x22x32xf32, #tpu.memory_space<vmem>>, vector<2x16x32xf32>
    %46 = vector.shape_cast %45 : vector<2x16x32xf32> to vector<32x32xf32>
    %c6_56 = arith.constant 6 : index
    %c0_57 = arith.constant 0 : index
    %c0_58 = arith.constant 0 : index
    %47 = vector.load %arg1[%c6_56, %c0_57, %c0_58] : memref<7x32x16xf32, #tpu.memory_space<vmem>>, vector<1x32x16xf32>
    %48 = vector.shape_cast %47 : vector<1x32x16xf32> to vector<32x16xf32>
    %cst_59 = arith.constant dense<0.000000e+00> : vector<32x16xf32>
    %49 = tpu.matmul %46, %48, %cst_59 {dimension_numbers = #tpu.dot_dimension_numbers<[1], [0], [0], [1], [0, 0, 1, 1], [], []>} : vector<32x32xf32>, vector<32x16xf32>, vector<32x16xf32> -> vector<32x16xf32>
    %50 = arith.addf %44, %49 : vector<32x16xf32>
    %51 = arith.negf %50 : vector<32x16xf32>
    %52 = math.exp %51 : vector<32x16xf32>
    %cst_60 = arith.constant 1.000000e+00 : f32
    %53 = vector.broadcast %cst_60 : f32 to vector<32x16xf32>
    %54 = arith.addf %53, %52 : vector<32x16xf32>
    %55 = arith.divf %53, %54 : vector<32x16xf32>
    %56 = vector.shape_cast %55 : vector<32x16xf32> to vector<2x1x16x16xf32>
    %c0_61 = arith.constant 0 : index
    %c0_62 = arith.constant 0 : index
    %c0_63 = arith.constant 0 : index
    %c0_64 = arith.constant 0 : index
    %57 = vector.load %arg4[%c0_61, %c0_62, %c0_63, %c0_64] : memref<2x1x16x16xf32, #tpu.memory_space<vmem>>, vector<2x1x16x16xf32>
    tpu.vector_store %arg4[%c0_61, %c0_62, %c0_63, %c0_64], %56 {strides = array<i32>} : memref<2x1x16x16xf32, #tpu.memory_space<vmem>>, vector<2x1x16x16xf32>,
    return
  }
  func.func @transform_0(%arg0: i32) -> (i32, i32, i32) {
    %c0_i32 = arith.constant 0 : i32
    %c0_i32_0 = arith.constant 0 : i32
    %c0_i32_1 = arith.constant 0 : i32
    %c0_i32_2 = arith.constant 0 : i32
    return %c0_i32, %c0_i32_0, %c0_i32_1 : i32, i32, i32
  }
  func.func @transform_1(%arg0: i32) -> (i32, i32, i32) {
    %c0_i32 = arith.constant 0 : i32
    %c0_i32_0 = arith.constant 0 : i32
    %c0_i32_1 = arith.constant 0 : i32
    return %arg0, %c0_i32, %c0_i32_0 : i32, i32, i32
  }
  func.func @transform_2(%arg0: i32) -> (i32, i32, i32) {
    %c0_i32 = arith.constant 0 : i32
    %c0_i32_0 = arith.constant 0 : i32
    %c0_i32_1 = arith.constant 0 : i32
    return %arg0, %c0_i32, %c0_i32_0 : i32, i32, i32
  }
  func.func @transform_3(%arg0: i32) -> (i32, i32, i32, i32) {
    %c0_i32 = arith.constant 0 : i32
    %c0_i32_0 = arith.constant 0 : i32
    %c0_i32_1 = arith.constant 0 : i32
    %c0_i32_2 = arith.constant 0 : i32
    return %arg0, %c0_i32, %c0_i32_0, %c0_i32_1 : i32, i32, i32, i32
  }
}

</mosaic_0001>

<llo_original>
// kernel: spatial_attention.2
$region0: #{spatial_attention.2}
  #allocation0 [shape = 'u32[]', space=smem, size = 0x4, offset = 0x4, fixed_abs, tag = 'smem constant byte address 0x4 - core index']
  #allocation1 [shape = 'u32[144,128]{1,0:T(1,128)}', space=vmem, size = 0x12000, scoped, tag = 'internal scratch']
  %s0 = inlined_call_operand.vmem [shape: f32[2,4,256], index: 0, kind: input, shape index: {}]
  %s1 = inlined_call_operand.vmem [shape: f32[2,1,256], index: 1, kind: output, shape index: {0}]
  %s2 = inlined_call_operand.vmem [shape: f32[2,1,256], index: 2, kind: output, shape index: {1}]
  %3 = xla_tuple %s1, %s2
  %s4 = sld [smem:[#allocation0]]
  $region53: #{spatial_attention.2} parent=0
    _
  %s6 = ssub.s32 1, %s4
  %s7 = scalar_select 0, %s6, %s4
  loop: start=0, step=1, limit=4
  $region2: #{spatial_attention.2} parent=0 // loop_pre_header
    _
  $region3: #{spatial_attention.2} parent=0 // loop_header
    %s9 = sphi 0, %s13
    %p10 = scmp.ge.s32.totalorder %s9, 4
    %s16 = sphi 0, %s35
    %s17 = sphi 0, %s31
    %s18 = sphi 0, %s27
    %s19 = sphi 0, %s16
    %s20 = sphi 0, %s17
    %s21 = sphi 0, %s18
    %s22 = sphi 0, %s19
    %s23 = sphi 0, %s20
    %s24 = sphi 0, %s21
    %s42 = sphi 0, %s44
    %s45 = sphi 0, %s42
    %s46 = sphi 0, %s45
    %s62 = sphi 0, %s46
    %s70 = sphi 0, %s72
    %s73 = sphi 0, %s70
    %s74 = sphi 0, %s73
    %s90 = sphi 0, %s74
    %s98 = sphi 0, %s100
    %s101 = sphi 0, %s98
    %s102 = sphi 0, %s101
    %s118 = sphi 0, %s102
  $region4: #{spatial_attention.2} parent=0 // loop_header_branch
    %12 = sbr.rel (%p10) target = $region8
  $region5: #{spatial_attention.2} parent=0 // loop_body
    %s14 = ssub.s32 %s9, 1
    %s15 = ssub.s32 %s9, 2
    %s25 = sadd.s32 1, %s18
    %p26 = scmp.ge.s32.totalorder %s25, 1
    %s27 = scalar_select %p26, 0, %s25
    %s28 = sadd.s32 1, %s17
    %s29 = scalar_select %p26, %s28, %s17
    %p30 = scmp.ge.s32.totalorder %s29, 1
    %s31 = scalar_select %p30, 0, %s29
    %s32 = sadd.s32 1, %s16
    %s33 = scalar_select %p30, %s32, %s16
    %p34 = scmp.ge.s32.totalorder %s33, 2
    %s35 = scalar_select %p34, 0, %s33
    %s36 = ssub.s32 %s16, %s35
    %s37 = ssub.s32 %s18, %s27
    %s38 = sor.u32 %s36, %s37
    %s39 = ssub.s32 %s17, %s31
    %s40 = sor.u32 %s38, %s39
    %p41 = scmp.eq.s32.totalorder %s40, 0
    %s43 = sadd.s32 %s42, 1
    %s44 = scalar_select %p41, %s42, %s43
    %p47 = pneg %p41
    %p48 = scmp.eq.s32.totalorder %s9, 1
    %p49 = por %p47, %p48
    %p50 = scmp.ne.s32.totalorder %s42, %s45
    %p51 = scmp.eq.s32.totalorder %s9, 0
    %p52 = por %p50, %p51
    %p53 = scmp.ne.s32.totalorder %s42, %s45
    %p54 = scmp.eq.s32.totalorder %s14, 1
    %p55 = por %p53, %p54
    %p56 = scmp.ne.s32.totalorder %s45, %s46
    %p57 = scmp.eq.s32.totalorder %s14, 0
    %p58 = por %p56, %p57
    %p59 = scmp.ne.s32.totalorder %s45, %s46
    %p60 = scmp.eq.s32.totalorder %s15, 1
    %p61 = por %p59, %p60
    %p63 = scmp.ne.s32.totalorder %s46, %s62
    %p64 = scmp.eq.s32.totalorder %s15, 0
    %p65 = por %p63, %p64
    %s66 = ssub.s32 %s16, %s35
    %s67 = ssub.s32 %s17, %s31
    %s68 = sor.u32 %s66, %s67
    %p69 = scmp.eq.s32.totalorder %s68, 0
    %s71 = sadd.s32 %s70, 1
    %s72 = scalar_select %p69, %s70, %s71
    %p75 = pneg %p69
    %p76 = scmp.eq.s32.totalorder %s9, 1
    %p77 = por %p75, %p76
    %p78 = scmp.ne.s32.totalorder %s70, %s73
    %p79 = scmp.eq.s32.totalorder %s9, 0
    %p80 = por %p78, %p79
    %p81 = scmp.ne.s32.totalorder %s70, %s73
    %p82 = scmp.eq.s32.totalorder %s14, 1
    %p83 = por %p81, %p82
    %p84 = scmp.ne.s32.totalorder %s73, %s74
    %p85 = scmp.eq.s32.totalorder %s14, 0
    %p86 = por %p84, %p85
    %p87 = scmp.ne.s32.totalorder %s73, %s74
    %p88 = scmp.eq.s32.totalorder %s15, 1
    %p89 = por %p87, %p88
    %p91 = scmp.ne.s32.totalorder %s74, %s90
    %p92 = scmp.eq.s32.totalorder %s15, 0
    %p93 = por %p91, %p92
    %s94 = ssub.s32 %s16, %s35
    %s95 = ssub.s32 %s17, %s31
    %s96 = sor.u32 %s94, %s95
    %p97 = scmp.eq.s32.totalorder %s96, 0
    %s99 = sadd.s32 %s98, 1
    %s100 = scalar_select %p97, %s98, %s99
    %p103 = pneg %p97
    %p104 = scmp.eq.s32.totalorder %s9, 1
    %p105 = por %p103, %p104
    %p106 = scmp.ne.s32.totalorder %s98, %s101
    %p107 = scmp.eq.s32.totalorder %s9, 0
    %p108 = por %p106, %p107
    %p109 = scmp.ne.s32.totalorder %s98, %s101
    %p110 = scmp.eq.s32.totalorder %s14, 1
    %p111 = por %p109, %p110
    %p112 = scmp.ne.s32.totalorder %s101, %s102
    %p113 = scmp.eq.s32.totalorder %s14, 0
    %p114 = por %p112, %p113
    %p115 = scmp.ne.s32.totalorder %s101, %s102
    %p116 = scmp.eq.s32.totalorder %s15, 1
    %p117 = por %p115, %p116
    %p119 = scmp.ne.s32.totalorder %s102, %s118
    %p120 = scmp.eq.s32.totalorder %s15, 0
    %p121 = por %p119, %p120
    %p122 = scmp.le.s32.totalorder 1, %s9
    %p123 = scmp.lt.s32.totalorder %s9, 3
    %p124 = pnand %p122, %p123
    %p125 = pneg %p124
    // Predicated region
    $region9: #{spatial_attention.2} parent=5 // pred_check
      _
    $region10: #{spatial_attention.2} parent=5 // pred_check_branch
      %127 = sbr.rel (%p124) target = $region12
    $region11: #{spatial_attention.2} parent=5 // pred_region
      %s128 = ssub.s32 %s9, 1
    $region12: #{spatial_attention.2} parent=5 // pred_fallthru
      _
    %p129 = scmp.lt.s32.totalorder %s9, 2
    // Predicated region
    $region13: #{spatial_attention.2} parent=5 // pred_check
      %p130 = pneg %p129
    $region14: #{spatial_attention.2} parent=5 // pred_check_branch
      %132 = sbr.rel (%p130) target = $region16
    $region15: #{spatial_attention.2} parent=5 // pred_region
      // Predicated region
      $region17: #{spatial_attention.2} parent=15 // pred_check
        %p133 = pneg %p52
      $region18: #{spatial_attention.2} parent=15 // pred_check_branch
        %135 = sbr.rel (%p133) target = $region20
      $region19: #{spatial_attention.2} parent=15 // pred_region
        %s136 = smul.u32 2, %s17
        %p137 = scmp.lt.s32.totalorder %s16, 1
        %s138 = scalar_select %p137, %s16, 1
        %p139 = scmp.lt.s32.totalorder %s18, 0
        %s140 = scalar_select %p139, %s18, 0
        %p141 = scmp.lt.s32.totalorder %s136, 1
        %s142 = scalar_select %p141, %s136, 1
        %s143 = smul.addr %s140, 2
        %s144 = sadd.s32 %s142, %s143
        %s145 = smul.addr %s138, 2
        %s146 = sadd.s32 %s144, %s145
        %s147 = smul.addr %s146, 4
        %s148 = scalar_lea.vmem %s0, %s147
        %s149 = smul.u32 2, %s17
      $region20: #{spatial_attention.2} parent=15 // pred_fallthru
        _
    $region16: #{spatial_attention.2} parent=5 // pred_fallthru
      _
    %p150 = scmp.le.s32.totalorder 1, %s9
    %p151 = scmp.lt.s32.totalorder %s9, 3
    %p152 = pnand %p150, %p151
    %p153 = pneg %p152
    // Predicated region
    $region21: #{spatial_attention.2} parent=5 // pred_check
      _
    $region22: #{spatial_attention.2} parent=5 // pred_check_branch
      %155 = sbr.rel (%p152) target = $region24
    $region23: #{spatial_attention.2} parent=5 // pred_region
      %s156 = ssub.s32 %s9, 1
      %s157 = smul.u32 2, %s20
      %p158 = scmp.lt.s32.totalorder %s19, 1
      %s159 = scalar_select %p158, %s19, 1
      %p160 = scmp.lt.s32.totalorder %s21, 0
      %s161 = scalar_select %p160, %s21, 0
      %p162 = scmp.lt.s32.totalorder %s157, 1
      %s163 = scalar_select %p162, %s157, 1
      %s164 = smul.addr %s161, 2
      %s165 = sadd.s32 %s163, %s164
      %s166 = smul.addr %s159, 2
      %s167 = sadd.s32 %s165, %s166
      %s168 = smul.addr %s167, 4
      %s169 = scalar_lea.vmem %s0, %s168
      %p170 = pneg %p58
      %p171 = pneg %p55
      %p172 = pneg %p86
      %p173 = pneg %p83
      %s174 = smul.u32 2, %s20
      %p175 = scmp.lt.s32.totalorder %s19, 1
      %s176 = scalar_select %p175, %s19, 1
      %p177 = scmp.lt.s32.totalorder %s174, 1
      %s178 = scalar_select %p177, %s174, 1
      %s179 = smul.addr %s176, 2
      %s180 = sadd.s32 %s178, %s179
      %s181 = scalar_lea.vmem %s1, %s180
      %p182 = pneg %p114
      %p183 = pneg %p111
      %s184 = smul.u32 2, %s20
      %p185 = scmp.lt.s32.totalorder %s19, 1
      %s186 = scalar_select %p185, %s19, 1
      %p187 = scmp.lt.s32.totalorder %s184, 1
      %s188 = scalar_select %p187, %s184, 1
      %s189 = smul.addr %s186, 2
      %s190 = sadd.s32 %s188, %s189
      %s191 = scalar_lea.vmem %s2, %s190
      %s192 = smul.u32 2, %s20
      %p193 = scmp.lt.s32.totalorder %s19, 1
      %s194 = scalar_select %p193, %s19, 1
      %p195 = scmp.lt.s32.totalorder %s21, 0
      %s196 = scalar_select %p195, %s21, 0
      %p197 = scmp.lt.s32.totalorder %s192, 1
      %s198 = scalar_select %p197, %s192, 1
      %s199 = smul.addr %s196, 2
      %s200 = sadd.s32 %s198, %s199
      %s201 = smul.addr %s194, 2
      %s202 = sadd.s32 %s200, %s201
      %s203 = smul.addr %s202, 4
      %s204 = scalar_lea.vmem %s0, %s203
      %s205 = smul.u32 2, %s20
      %s206 = smul.u32 2, %s20
      %p207 = scmp.lt.s32.totalorder %s19, 1
      %s208 = scalar_select %p207, %s19, 1
      %p209 = scmp.lt.s32.totalorder %s206, 1
      %s210 = scalar_select %p209, %s206, 1
      %s211 = smul.addr %s208, 2
      %s212 = sadd.s32 %s210, %s211
      %s213 = scalar_lea.vmem %s1, %s212
      %s214 = smul.u32 2, %s20
      %s215 = smul.u32 2, %s20
      %p216 = scmp.lt.s32.totalorder %s19, 1
      %s217 = scalar_select %p216, %s19, 1
      %p218 = scmp.lt.s32.totalorder %s215, 1
      %s219 = scalar_select %p218, %s215, 1
      %s220 = smul.addr %s217, 2
      %s221 = sadd.s32 %s219, %s220
      %s222 = scalar_lea.vmem %s2, %s221
      %s223 = smul.u32 2, %s20
      %p224 = scmp.eq.s32.totalorder %s21, 0
      // Predicated region
      $region25: #{spatial_attention.2} parent=23 // pred_check
        %p225 = pneg %p224
      $region26: #{spatial_attention.2} parent=23 // pred_check_branch
        %227 = sbr.rel (%p225) target = $region28
      $region27: #{spatial_attention.2} parent=23 // pred_region
        %v228 = vlaneseq
        %vm229 = vcmp.ge.s32.totalorder %v228, 0
        %vm230 = vcmp.lt.s32.totalorder %v228, 256
        %vm231 = vmand %vm229, %vm230
        %232 = vst.msk [vmem:[%s213] sm:$0x3] %vm231, 0.0
        %233 = vst.msk [vmem:[%s222] sm:$0x3] %vm231, -inf
      $region28: #{spatial_attention.2} parent=23 // pred_fallthru
        _
      %v234 = vld [vmem:[%s204] sm:$0xff]
      %v235 = vld [vmem:[%s213] sm:$0x3]
      %v237 = vcombine.high %v234, %v234
      %vm239 = vcmask 1043456
      %v240 = vsel %vm239, %v234, 0.0
      %v241 = vrot.slane %v240, 4
      %v242 = vadd.f32 %v240, %v241
      %v243 = vrot.slane %v242, 2
      %v244 = vadd.f32 %v242, %v243
      %v245 = vrot.slane %v244, 1
      %v246 = vadd.f32 %v244, %v245
      %v247 = vsel %vm239, %v237, 0.0
      %v248 = vrot.slane %v247, 4
      %v249 = vadd.f32 %v247, %v248
      %v250 = vrot.slane %v249, 2
      %v251 = vadd.f32 %v249, %v250
      %v252 = vrot.slane %v251, 1
      %v253 = vadd.f32 %v251, %v252
      %v256 = vcombine.low %v246, %v253
      %v258 = vunpack.c.l.s4 1966171168
      %v259 = vunpack.c.0.s8 %v258
      %v260 = vlaneseq
      %v261 = vshrl.u32 %v260, 7
      %v262 = vsub.s32 %v259, %v261
      %v263 = vrot.slane %v256, %v262
      %v265 = vunpack.c.l.s4 1966171168
      %v266 = vunpack.c.0.s8 %v265
      %v267 = vlaneseq
      %v268 = vshrl.u32 %v267, 7
      %v269 = vsub.s32 %v266, %v268
      %v270 = vrot.slane %v263, %v269
      %v272 = vadd.f32 %v235, %v270
      %v273 = vlaneseq
      %vm274 = vcmp.ge.s32.totalorder %v273, 0
      %vm275 = vcmp.lt.s32.totalorder %v273, 256
      %vm276 = vmand %vm274, %vm275
      %277 = vst.msk [vmem:[%s213] sm:$0x3] %vm276, %v272
      %v278 = vld [vmem:[%s222] sm:$0x3]
      %v279 = vsel %vm239, %v234, -inf
      %v280 = vrot.slane %v279, 4
      %v281 = vmax.f32 %v279, %v280
      %v282 = vrot.slane %v281, 2
      %v283 = vmax.f32 %v281, %v282
      %v284 = vrot.slane %v283, 1
      %v285 = vmax.f32 %v283, %v284
      %v286 = vsel %vm239, %v237, -inf
      %v287 = vrot.slane %v286, 4
      %v288 = vmax.f32 %v286, %v287
      %v289 = vrot.slane %v288, 2
      %v290 = vmax.f32 %v288, %v289
      %v291 = vrot.slane %v290, 1
      %v292 = vmax.f32 %v290, %v291
      %v295 = vcombine.low %v285, %v292
      %v297 = vunpack.c.l.s4 1966171168
      %v298 = vunpack.c.0.s8 %v297
      %v299 = vlaneseq
      %v300 = vshrl.u32 %v299, 7
      %v301 = vsub.s32 %v298, %v300
      %v302 = vrot.slane %v295, %v301
      %v304 = vunpack.c.l.s4 1966171168
      %v305 = vunpack.c.0.s8 %v304
      %v306 = vlaneseq
      %v307 = vshrl.u32 %v306, 7
      %v308 = vsub.s32 %v305, %v307
      %v309 = vrot.slane %v302, %v308
      %v311 = vmax.f32 %v278, %v309
      %312 = vst.msk [vmem:[%s222] sm:$0x3] %vm276, %v311
      // Predicated region
      $region29: #{spatial_attention.2} parent=23 // pred_check
        %p313 = pneg %p224
      $region30: #{spatial_attention.2} parent=23 // pred_check_branch
        %315 = sbr.rel (%p313) target = $region32
      $region31: #{spatial_attention.2} parent=23 // pred_region
        %v316 = vld [vmem:[%s213] sm:$0x3]
        %v317 = vmul.f32 %v316, 0.25
        %318 = vst.msk [vmem:[%s213] sm:$0x3] %vm276, %v317
      $region32: #{spatial_attention.2} parent=23 // pred_fallthru
        _
      %s319 = smul.u32 2, %s20
      %p320 = scmp.lt.s32.totalorder %s19, 1
      %s321 = scalar_select %p320, %s19, 1
      %p322 = scmp.lt.s32.totalorder %s319, 1
      %s323 = scalar_select %p322, %s319, 1
      %s324 = smul.addr %s321, 2
      %s325 = sadd.s32 %s323, %s324
      %s326 = scalar_lea.vmem %s1, %s325
      %s327 = smul.u32 2, %s20
      %p328 = scmp.lt.s32.totalorder %s19, 1
      %s329 = scalar_select %p328, %s19, 1
      %p330 = scmp.lt.s32.totalorder %s327, 1
      %s331 = scalar_select %p330, %s327, 1
      %s332 = smul.addr %s329, 2
      %s333 = sadd.s32 %s331, %s332
      %s334 = scalar_lea.vmem %s2, %s333
      // Predicated region
      $region33: #{spatial_attention.2} parent=23 // pred_check
        %p335 = pneg %p83
      $region34: #{spatial_attention.2} parent=23 // pred_check_branch
        %337 = sbr.rel (%p335) target = $region36
      $region35: #{spatial_attention.2} parent=23 // pred_region
        %s338 = smul.u32 2, %s20
      $region36: #{spatial_attention.2} parent=23 // pred_fallthru
        _
      // Predicated region
      $region37: #{spatial_attention.2} parent=23 // pred_check
        %p339 = pneg %p111
      $region38: #{spatial_attention.2} parent=23 // pred_check_branch
        %341 = sbr.rel (%p339) target = $region40
      $region39: #{spatial_attention.2} parent=23 // pred_region
        %s342 = smul.u32 2, %s20
      $region40: #{spatial_attention.2} parent=23 // pred_fallthru
        _
    $region24: #{spatial_attention.2} parent=5 // pred_fallthru
      _
    %p343 = scmp.le.s32.totalorder 2, %s9
    // Predicated region
    $region41: #{spatial_attention.2} parent=5 // pred_check
      %p344 = pneg %p343
    $region42: #{spatial_attention.2} parent=5 // pred_check_branch
      %346 = sbr.rel (%p344) target = $region44
    $region43: #{spatial_attention.2} parent=5 // pred_region
      %s347 = ssub.s32 %s9, 2
      // Predicated region
      $region45: #{spatial_attention.2} parent=43 // pred_check
        %p348 = pneg %p89
      $region46: #{spatial_attention.2} parent=43 // pred_check_branch
        %350 = sbr.rel (%p348) target = $region48
      $region47: #{spatial_attention.2} parent=43 // pred_region
        %s351 = smul.u32 2, %s23
        %p352 = scmp.lt.s32.totalorder %s22, 1
        %s353 = scalar_select %p352, %s22, 1
        %p354 = scmp.lt.s32.totalorder %s351, 1
        %s355 = scalar_select %p354, %s351, 1
        %s356 = smul.addr %s353, 2
        %s357 = sadd.s32 %s355, %s356
        %s358 = scalar_lea.vmem %s1, %s357
      $region48: #{spatial_attention.2} parent=43 // pred_fallthru
        _
      // Predicated region
      $region49: #{spatial_attention.2} parent=43 // pred_check
        %p359 = pneg %p117
      $region50: #{spatial_attention.2} parent=43 // pred_check_branch
        %361 = sbr.rel (%p359) target = $region52
      $region51: #{spatial_attention.2} parent=43 // pred_region
        %s362 = smul.u32 2, %s23
        %p363 = scmp.lt.s32.totalorder %s22, 1
        %s364 = scalar_select %p363, %s22, 1
        %p365 = scmp.lt.s32.totalorder %s362, 1
        %s366 = scalar_select %p365, %s362, 1
        %s367 = smul.addr %s364, 2
        %s368 = sadd.s32 %s366, %s367
        %s369 = scalar_lea.vmem %s2, %s368
      $region52: #{spatial_attention.2} parent=43 // pred_fallthru
        _
    $region44: #{spatial_attention.2} parent=5 // pred_fallthru
      _
  $region6: #{spatial_attention.2} parent=0 // loop_footer
    %s13 = sadd.s32 1, %s9
  $region7: #{spatial_attention.2} parent=0 // loop_footer_branch
    %8 = sbr.rel target = $region3
  $region8: #{spatial_attention.2} parent=0 // loop_exit
    _

// kernel: spatial_attention.3
$region0: #{spatial_attention.3}
  #allocation0 [shape = 'u32[]', space=smem, size = 0x4, offset = 0x4, fixed_abs, tag = 'smem constant byte address 0x4 - core index']
  #allocation1 [shape = 'u32[144,128]{1,0:T(1,128)}', space=vmem, size = 0x12000, scoped, tag = 'internal scratch']
  #allocation2 [shape = 'f32[2,22,32]{2,1,0:T(8,128)}', space=vmem, size = 0x6000, scoped, tag = 'scratch operand']
  %s0 = inlined_call_operand.vmem [shape: f32[7,32,16], index: 0, kind: input, shape index: {}]
  %s1 = inlined_call_operand.vmem [shape: f32[2,16,16], index: 1, kind: input, shape index: {}]
  %s2 = inlined_call_operand.vmem [shape: f32[2,16,16], index: 2, kind: input, shape index: {}]
  %s3 = inlined_call_operand.hbm [shape: f32[2,1,16,16], index: 3, kind: output, shape index: {}]
  %s4 = sld [smem:[#allocation0]]
  $region22: #{spatial_attention.3} parent=0
    _
  %s6 = ssub.s32 1, %s4
  %s7 = scalar_select 0, %s6, %s4
  $region1: #{spatial_attention.3} parent=0
    #allocation3 [shape = 'u8[16384]{0}', space=vmem, size = 0x4000, scoped, tag = 'output window, operand 0, single buffered']
    #allocation4 [shape = 's32[1]{0}', space=sflag, size = 0x4, scoped, tag = 'scoped memory for spatial_attention.3']
    %8 = vsyncpa [#allocation4], 0
    // Predicated region
    $region2: #{spatial_attention.3} parent=1 // pred_check
      _
    $region3: #{spatial_attention.3} parent=1 // pred_check_branch
      %10 = sbr.rel (0) target = $region5
    $region4: #{spatial_attention.3} parent=1 // pred_region
      _
    $region5: #{spatial_attention.3} parent=1 // pred_fallthru
      _
    // Predicated region
    $region6: #{spatial_attention.3} parent=1 // pred_check
      _
    $region7: #{spatial_attention.3} parent=1 // pred_check_branch
      %12 = sbr.rel (0) target = $region9
    $region8: #{spatial_attention.3} parent=1 // pred_region
      _
    $region9: #{spatial_attention.3} parent=1 // pred_fallthru
      _
    // Predicated region
    $region10: #{spatial_attention.3} parent=1 // pred_check
      _
    $region11: #{spatial_attention.3} parent=1 // pred_check_branch
      %14 = sbr.rel (0) target = $region13
    $region12: #{spatial_attention.3} parent=1 // pred_region
      _
    $region13: #{spatial_attention.3} parent=1 // pred_fallthru
      _
    %vm15 = vcmask 256000
    %16 = vst.msk [vmem:[#allocation2] sm:$0x7] %vm15, 0.0
    %17 = vst.msk [vmem:[#allocation2 + $0x18] sm:$0x7] %vm15, 0.0
    %18 = vst.msk [vmem:[#allocation2 + $0x13] sm:$0x7] %vm15, 0.0
    %19 = vst.msk [vmem:[#allocation2 + $0x2b] sm:$0x7] %vm15, 0.0
    %v20 = vld [vmem:[%s1] sm:$0xff]
    %v21 = vld [vmem:[%s1 + $0x8] sm:$0xff]
    %v22 = vld [vmem:[%s1 + $0x10] sm:$0xff]
    %v23 = vld [vmem:[%s1 + $0x18] sm:$0xff]
    %vm24 = vcmask 130048
    %25 = vst.msk [vmem:[#allocation2 + $0x3] sm:$0xff] %vm24, %v20
    %26 = vst.msk [vmem:[#allocation2 + $0xb] sm:$0xff] %vm24, %v21
    %27 = vst.msk [vmem:[#allocation2 + $0x1b] sm:$0xff] %vm24, %v22
    %28 = vst.msk [vmem:[#allocation2 + $0x23] sm:$0xff] %vm24, %v23
    %v29 = vld [vmem:[%s2] sm:$0xff]
    %v30 = vld [vmem:[%s2 + $0x8] sm:$0xff]
    %v31 = vld [vmem:[%s2 + $0x10] sm:$0xff]
    %v32 = vld [vmem:[%s2 + $0x18] sm:$0xff]
    %37 = vrot.lane.b32.xlu0 %v29, 16
    %v38 = vpop.permute.xlu0 %37
    %39 = vrot.lane.b32.xlu0 %v30, 16
    %v40 = vpop.permute.xlu0 %39
    %41 = vrot.lane.b32.xlu0 %v31, 16
    %v42 = vpop.permute.xlu0 %41
    %43 = vrot.lane.b32.xlu0 %v32, 16
    %v44 = vpop.permute.xlu0 %43
    %vm49 = vcmask 261248
    %50 = vst.msk [vmem:[#allocation2 + $0x3] sm:$0xff] %vm49, %v38
    %51 = vst.msk [vmem:[#allocation2 + $0xb] sm:$0xff] %vm49, %v40
    %52 = vst.msk [vmem:[#allocation2 + $0x1b] sm:$0xff] %vm49, %v42
    %53 = vst.msk [vmem:[#allocation2 + $0x23] sm:$0xff] %vm49, %v44
    %v54 = vld [vmem:[#allocation2] sm:$0xff]
    %v55 = vld [vmem:[#allocation2 + $0x8] sm:$0xff]
    %v56 = vld [vmem:[#allocation2 + $0x18] sm:$0xff]
    %v57 = vld [vmem:[#allocation2 + $0x20] sm:$0xff]
    %v58 = vld [vmem:[%s0] sm:$0xff]
    %v59 = vld [vmem:[%s0 + $0x8] sm:$0xff]
    %v60 = vld [vmem:[%s0 + $0x10] sm:$0xff]
    %v61 = vld [vmem:[%s0 + $0x18] sm:$0xff]
    %v62 = vld [vmem:[#allocation2 + $0x1] sm:$0xff]
    %v63 = vld [vmem:[#allocation2 + $0x9] sm:$0xff]
    %v64 = vld [vmem:[#allocation2 + $0x19] sm:$0xff]
    %v65 = vld [vmem:[#allocation2 + $0x21] sm:$0xff]
    %s66 = scalar_lea.vmem %s0, 32
    %v67 = vld [vmem:[%s66] sm:$0xff]
    %v68 = vld [vmem:[%s66 + $0x8] sm:$0xff]
    %v69 = vld [vmem:[%s66 + $0x10] sm:$0xff]
    %v70 = vld [vmem:[%s66 + $0x18] sm:$0xff]
    %vm71 = vcmask 261120
    %v73 = vsel %vm71, %v62, 0
    %v76 = vsel %vm71, %v63, 0
    %v79 = vsel %vm71, %v64, 0
    %v82 = vsel %vm71, %v65, 0
    %84 = vmatprep.subr.mxu0 0.0
    %85 = vmatpush1.msra.mxu0 0.0
    %86 = vmatprep.subr.mxu0 0.0
    %87 = vmatpush1.msra.mxu0 0.0
    %88 = vmatprep.subr.mxu0 0.0
    %89 = vmatpush1.msra.mxu0 0.0
    %90 = vmatprep.subr.mxu0 0.0
    %91 = vmatpush1.msra.mxu0 0.0
    %92 = vmatprep.subr.mxu0 0.0
    %93 = vmatpush1.msra.mxu0 0.0
    %94 = vmatprep.subr.mxu0 0.0
    %95 = vmatpush1.msra.mxu0 0.0
    %96 = vmatprep.subr.mxu0 0.0
    %97 = vmatpush1.msra.mxu0 0.0
    %98 = vmatprep.subr.mxu0 0.0
    %99 = vmatpush1.msra.mxu0 0.0
    %100 = vmatprep.subr.mxu0 0.0
    %101 = vmatpush1.msra.mxu0 0.0
    %102 = vmatprep.subr.mxu0 0.0
    %103 = vmatpush1.msra.mxu0 0.0
    %104 = vmatprep.subr.mxu0 0.0
    %105 = vmatpush1.msra.mxu0 0.0
    %106 = vmatprep.subr.mxu0 0.0
    %107 = vmatpush1.msra.mxu0 0.0
    %108 = vmatprep.subr.mxu0 0.0
    %109 = vmatpush1.msra.mxu0 %v70
    %110 = vmatprep.subr.mxu0 0.0
    %111 = vmatpush1.msra.mxu0 %v69
    %112 = vmatprep.subr.mxu0 0.0
    %113 = vmatpush1.msra.mxu0 %v68
    %114 = vmatprep.subr.mxu0 0.0
    %115 = vmatpush1.msra.mxu0 %v67
    %116 = vmatprep.subr.mxu0 0.0
    %117 = vmatpush2.msra.mxu0 0.0
    %118 = vmatprep.subr.mxu0 0.0
    %119 = vmatpush2.msra.mxu0 0.0
    %120 = vmatprep.subr.mxu0 0.0
    %121 = vmatpush2.msra.mxu0 0.0
    %122 = vmatprep.subr.mxu0 0.0
    %123 = vmatpush2.msra.mxu0 0.0
    %124 = vmatprep.subr.mxu0 0.0
    %125 = vmatpush2.msra.mxu0 0.0
    %126 = vmatprep.subr.mxu0 0.0
    %127 = vmatpush2.msra.mxu0 0.0
    %128 = vmatprep.subr.mxu0 0.0
    %129 = vmatpush2.msra.mxu0 0.0
    %130 = vmatprep.subr.mxu0 0.0
    %131 = vmatpush2.msra.mxu0 0.0
    %132 = vmatprep.subr.mxu0 0.0
    %133 = vmatpush2.msra.mxu0 0.0
    %134 = vmatprep.subr.mxu0 0.0
    %135 = vmatpush2.msra.mxu0 0.0
    %136 = vmatprep.subr.mxu0 0.0
    %137 = vmatpush2.msra.mxu0 0.0
    %138 = vmatprep.subr.mxu0 0.0
    %139 = vmatpush2.msra.mxu0 0.0
    %140 = vmatprep.subr.mxu0 0.0
    %141 = vmatpush2.msra.mxu0 0.0
    %142 = vmatprep.subr.mxu0 0.0
    %143 = vmatpush2.msra.mxu0 0.0
    %144 = vmatprep.subr.mxu0 0.0
    %145 = vmatpush2.msra.mxu0 0.0
    %146 = vmatprep.subr.mxu0 0.0
    %147 = vmatpush2.msra.mxu0 0.0
    %148 = vmatprep.mubr.f32.mxu0 0.0
    %149 = vmatmul.mubr.f32.gmra.mxu0 %v73
    %v150 = vpop.f32.mrf.mxu0
    %v151 = vadd.f32 0.0, %v150
    %v152 = vpop.f32.mrf.mxu0
    %153 = vmatprep.mubr.f32.mxu0 0.0
    %154 = vmatmul.mubr.f32.gmra.mxu0 %v76
    %v155 = vpop.f32.mrf.mxu0
    %v156 = vadd.f32 0.0, %v155
    %v157 = vpop.f32.mrf.mxu0
    %158 = vmatprep.mubr.f32.mxu0 0.0
    %159 = vmatmul.mubr.f32.gmra.mxu0 %v79
    %v160 = vpop.f32.mrf.mxu0
    %v161 = vadd.f32 0.0, %v160
    %v162 = vpop.f32.mrf.mxu0
    %163 = vmatprep.mubr.f32.mxu0 0.0
    %164 = vmatmul.mubr.f32.gmra.mxu0 %v82
    %v165 = vpop.f32.mrf.mxu0
    %v166 = vadd.f32 0.0, %v165
    %v167 = vpop.f32.mrf.mxu0
    %168 = vdwg.mxu0
    %v170 = vsel %vm71, %v54, 0
    %v173 = vsel %vm71, %v55, 0
    %v176 = vsel %vm71, %v56, 0
    %v179 = vsel %vm71, %v57, 0
    %181 = vmatprep.subr.mxu0 0.0
    %182 = vmatpush1.msra.mxu0 0.0
    %183 = vmatprep.subr.mxu0 0.0
    %184 = vmatpush1.msra.mxu0 0.0
    %185 = vmatprep.subr.mxu0 0.0
    %186 = vmatpush1.msra.mxu0 0.0
    %187 = vmatprep.subr.mxu0 0.0
    %188 = vmatpush1.msra.mxu0 0.0
    %189 = vmatprep.subr.mxu0 0.0
    %190 = vmatpush1.msra.mxu0 0.0
    %191 = vmatprep.subr.mxu0 0.0
    %192 = vmatpush1.msra.mxu0 0.0
    %193 = vmatprep.subr.mxu0 0.0
    %194 = vmatpush1.msra.mxu0 0.0
    %195 = vmatprep.subr.mxu0 0.0
    %196 = vmatpush1.msra.mxu0 0.0
    %197 = vmatprep.subr.mxu0 0.0
    %198 = vmatpush1.msra.mxu0 0.0
    %199 = vmatprep.subr.mxu0 0.0
    %200 = vmatpush1.msra.mxu0 0.0
    %201 = vmatprep.subr.mxu0 0.0
    %202 = vmatpush1.msra.mxu0 0.0
    %203 = vmatprep.subr.mxu0 0.0
    %204 = vmatpush1.msra.mxu0 0.0
    %205 = vmatprep.subr.mxu0 0.0
    %206 = vmatpush1.msra.mxu0 %v61
    %207 = vmatprep.subr.mxu0 0.0
    %208 = vmatpush1.msra.mxu0 %v60
    %209 = vmatprep.subr.mxu0 0.0
    %210 = vmatpush1.msra.mxu0 %v59
    %211 = vmatprep.subr.mxu0 0.0
    %212 = vmatpush1.msra.mxu0 %v58
    %213 = vmatprep.subr.mxu0 0.0
    %214 = vmatpush2.msra.mxu0 0.0
    %215 = vmatprep.subr.mxu0 0.0
    %216 = vmatpush2.msra.mxu0 0.0
    %217 = vmatprep.subr.mxu0 0.0
    %218 = vmatpush2.msra.mxu0 0.0
    %219 = vmatprep.subr.mxu0 0.0
    %220 = vmatpush2.msra.mxu0 0.0
    %221 = vmatprep.subr.mxu0 0.0
    %222 = vmatpush2.msra.mxu0 0.0
    %223 = vmatprep.subr.mxu0 0.0
    %224 = vmatpush2.msra.mxu0 0.0
    %225 = vmatprep.subr.mxu0 0.0
    %226 = vmatpush2.msra.mxu0 0.0
    %227 = vmatprep.subr.mxu0 0.0
    %228 = vmatpush2.msra.mxu0 0.0
    %229 = vmatprep.subr.mxu0 0.0
    %230 = vmatpush2.msra.mxu0 0.0
    %231 = vmatprep.subr.mxu0 0.0
    %232 = vmatpush2.msra.mxu0 0.0
    %233 = vmatprep.subr.mxu0 0.0
    %234 = vmatpush2.msra.mxu0 0.0
    %235 = vmatprep.subr.mxu0 0.0
    %236 = vmatpush2.msra.mxu0 0.0
    %237 = vmatprep.subr.mxu0 0.0
    %238 = vmatpush2.msra.mxu0 0.0
    %239 = vmatprep.subr.mxu0 0.0
    %240 = vmatpush2.msra.mxu0 0.0
    %241 = vmatprep.subr.mxu0 0.0
    %242 = vmatpush2.msra.mxu0 0.0
    %243 = vmatprep.subr.mxu0 0.0
    %244 = vmatpush2.msra.mxu0 0.0
    %245 = vmatprep.mubr.f32.mxu0 0.0
    %246 = vmatmul.mubr.f32.gmra.mxu0 %v170
    %v247 = vpop.f32.mrf.mxu0
    %v248 = vadd.f32 %v151, %v247
    %v249 = vpop.f32.mrf.mxu0
    %250 = vmatprep.mubr.f32.mxu0 0.0
    %251 = vmatmul.mubr.f32.gmra.mxu0 %v173
    %v252 = vpop.f32.mrf.mxu0
    %v253 = vadd.f32 %v156, %v252
    %v254 = vpop.f32.mrf.mxu0
    %255 = vmatprep.mubr.f32.mxu0 0.0
    %256 = vmatmul.mubr.f32.gmra.mxu0 %v176
    %v257 = vpop.f32.mrf.mxu0
    %v258 = vadd.f32 %v161, %v257
    %v259 = vpop.f32.mrf.mxu0
    %260 = vmatprep.mubr.f32.mxu0 0.0
    %261 = vmatmul.mubr.f32.gmra.mxu0 %v179
    %v262 = vpop.f32.mrf.mxu0
    %v263 = vadd.f32 %v166, %v262
    %v264 = vpop.f32.mrf.mxu0
    %265 = vdwg.mxu0
    %v266 = vld [vmem:[#allocation2 + $0x2] sm:$0xff]
    %v267 = vld [vmem:[#allocation2 + $0xa] sm:$0xff]
    %v268 = vld [vmem:[#allocation2 + $0x1a] sm:$0xff]
    %v269 = vld [vmem:[#allocation2 + $0x22] sm:$0xff]
    %s270 = scalar_lea.vmem %s0, 64
    %v271 = vld [vmem:[%s270] sm:$0xff]
    %v272 = vld [vmem:[%s270 + $0x8] sm:$0xff]
    %v273 = vld [vmem:[%s270 + $0x10] sm:$0xff]
    %v274 = vld [vmem:[%s270 + $0x18] sm:$0xff]
    %v276 = vsel %vm71, %v266, 0
    %v279 = vsel %vm71, %v267, 0
    %v282 = vsel %vm71, %v268, 0
    %v285 = vsel %vm71, %v269, 0
    %287 = vmatprep.subr.mxu0 0.0
    %288 = vmatpush1.msra.mxu0 0.0
    %289 = vmatprep.subr.mxu0 0.0
    %290 = vmatpush1.msra.mxu0 0.0
    %291 = vmatprep.subr.mxu0 0.0
    %292 = vmatpush1.msra.mxu0 0.0
    %293 = vmatprep.subr.mxu0 0.0
    %294 = vmatpush1.msra.mxu0 0.0
    %295 = vmatprep.subr.mxu0 0.0
    %296 = vmatpush1.msra.mxu0 0.0
    %297 = vmatprep.subr.mxu0 0.0
    %298 = vmatpush1.msra.mxu0 0.0
    %299 = vmatprep.subr.mxu0 0.0
    %300 = vmatpush1.msra.mxu0 0.0
    %301 = vmatprep.subr.mxu0 0.0
    %302 = vmatpush1.msra.mxu0 0.0
    %303 = vmatprep.subr.mxu0 0.0
    %304 = vmatpush1.msra.mxu0 0.0
    %305 = vmatprep.subr.mxu0 0.0
    %306 = vmatpush1.msra.mxu0 0.0
    %307 = vmatprep.subr.mxu0 0.0
    %308 = vmatpush1.msra.mxu0 0.0
    %309 = vmatprep.subr.mxu0 0.0
    %310 = vmatpush1.msra.mxu0 0.0
    %311 = vmatprep.subr.mxu0 0.0
    %312 = vmatpush1.msra.mxu0 %v274
    %313 = vmatprep.subr.mxu0 0.0
    %314 = vmatpush1.msra.mxu0 %v273
    %315 = vmatprep.subr.mxu0 0.0
    %316 = vmatpush1.msra.mxu0 %v272
    %317 = vmatprep.subr.mxu0 0.0
    %318 = vmatpush1.msra.mxu0 %v271
    %319 = vmatprep.subr.mxu0 0.0
    %320 = vmatpush2.msra.mxu0 0.0
    %321 = vmatprep.subr.mxu0 0.0
    %322 = vmatpush2.msra.mxu0 0.0
    %323 = vmatprep.subr.mxu0 0.0
    %324 = vmatpush2.msra.mxu0 0.0
    %325 = vmatprep.subr.mxu0 0.0
    %326 = vmatpush2.msra.mxu0 0.0
    %327 = vmatprep.subr.mxu0 0.0
    %328 = vmatpush2.msra.mxu0 0.0
    %329 = vmatprep.subr.mxu0 0.0
    %330 = vmatpush2.msra.mxu0 0.0
    %331 = vmatprep.subr.mxu0 0.0
    %332 = vmatpush2.msra.mxu0 0.0
    %333 = vmatprep.subr.mxu0 0.0
    %334 = vmatpush2.msra.mxu0 0.0
    %335 = vmatprep.subr.mxu0 0.0
    %336 = vmatpush2.msra.mxu0 0.0
    %337 = vmatprep.subr.mxu0 0.0
    %338 = vmatpush2.msra.mxu0 0.0
    %339 = vmatprep.subr.mxu0 0.0
    %340 = vmatpush2.msra.mxu0 0.0
    %341 = vmatprep.subr.mxu0 0.0
    %342 = vmatpush2.msra.mxu0 0.0
    %343 = vmatprep.subr.mxu0 0.0
    %344 = vmatpush2.msra.mxu0 0.0
    %345 = vmatprep.subr.mxu0 0.0
    %346 = vmatpush2.msra.mxu0 0.0
    %347 = vmatprep.subr.mxu0 0.0
    %348 = vmatpush2.msra.mxu0 0.0
    %349 = vmatprep.subr.mxu0 0.0
    %350 = vmatpush2.msra.mxu0 0.0
    %351 = vmatprep.mubr.f32.mxu0 0.0
    %352 = vmatmul.mubr.f32.gmra.mxu0 %v276
    %v353 = vpop.f32.mrf.mxu0
    %v354 = vadd.f32 0.0, %v353
    %v355 = vpop.f32.mrf.mxu0
    %356 = vmatprep.mubr.f32.mxu0 0.0
    %357 = vmatmul.mubr.f32.gmra.mxu0 %v279
    %v358 = vpop.f32.mrf.mxu0
    %v359 = vadd.f32 0.0, %v358
    %v360 = vpop.f32.mrf.mxu0
    %361 = vmatprep.mubr.f32.mxu0 0.0
    %362 = vmatmul.mubr.f32.gmra.mxu0 %v282
    %v363 = vpop.f32.mrf.mxu0
    %v364 = vadd.f32 0.0, %v363
    %v365 = vpop.f32.mrf.mxu0
    %366 = vmatprep.mubr.f32.mxu0 0.0
    %367 = vmatmul.mubr.f32.gmra.mxu0 %v285
    %v368 = vpop.f32.mrf.mxu0
    %v369 = vadd.f32 0.0, %v368
    %v370 = vpop.f32.mrf.mxu0
    %371 = vdwg.mxu0
    %v372 = vadd.f32 %v248, %v354
    %v373 = vadd.f32 %v253, %v359
    %v374 = vadd.f32 %v258, %v364
    %v375 = vadd.f32 %v263, %v369
    %v376 = vld [vmem:[#allocation2 + $0x3] sm:$0xff]
    %v377 = vld [vmem:[#allocation2 + $0xb] sm:$0xff]
    %v378 = vld [vmem:[#allocation2 + $0x1b] sm:$0xff]
    %v379 = vld [vmem:[#allocation2 + $0x23] sm:$0xff]
    %s380 = scalar_lea.vmem %s0, 96
    %v381 = vld [vmem:[%s380] sm:$0xff]
    %v382 = vld [vmem:[%s380 + $0x8] sm:$0xff]
    %v383 = vld [vmem:[%s380 + $0x10] sm:$0xff]
    %v384 = vld [vmem:[%s380 + $0x18] sm:$0xff]
    %v386 = vsel %vm71, %v376, 0
    %v389 = vsel %vm71, %v377, 0
    %v392 = vsel %vm71, %v378, 0
    %v395 = vsel %vm71, %v379, 0
    %397 = vmatprep.subr.mxu0 0.0
    %398 = vmatpush1.msra.mxu0 0.0
    %399 = vmatprep.subr.mxu0 0.0
    %400 = vmatpush1.msra.mxu0 0.0
    %401 = vmatprep.subr.mxu0 0.0
    %402 = vmatpush1.msra.mxu0 0.0
    %403 = vmatprep.subr.mxu0 0.0
    %404 = vmatpush1.msra.mxu0 0.0
    %405 = vmatprep.subr.mxu0 0.0
    %406 = vmatpush1.msra.mxu0 0.0
    %407 = vmatprep.subr.mxu0 0.0
    %408 = vmatpush1.msra.mxu0 0.0
    %409 = vmatprep.subr.mxu0 0.0
    %410 = vmatpush1.msra.mxu0 0.0
    %411 = vmatprep.subr.mxu0 0.0
    %412 = vmatpush1.msra.mxu0 0.0
    %413 = vmatprep.subr.mxu0 0.0
    %414 = vmatpush1.msra.mxu0 0.0
    %415 = vmatprep.subr.mxu0 0.0
    %416 = vmatpush1.msra.mxu0 0.0
    %417 = vmatprep.subr.mxu0 0.0
    %418 = vmatpush1.msra.mxu0 0.0
    %419 = vmatprep.subr.mxu0 0.0
    %420 = vmatpush1.msra.mxu0 0.0
    %421 = vmatprep.subr.mxu0 0.0
    %422 = vmatpush1.msra.mxu0 %v384
    %423 = vmatprep.subr.mxu0 0.0
    %424 = vmatpush1.msra.mxu0 %v383
    %425 = vmatprep.subr.mxu0 0.0
    %426 = vmatpush1.msra.mxu0 %v382
    %427 = vmatprep.subr.mxu0 0.0
    %428 = vmatpush1.msra.mxu0 %v381
    %429 = vmatprep.subr.mxu0 0.0
    %430 = vmatpush2.msra.mxu0 0.0
    %431 = vmatprep.subr.mxu0 0.0
    %432 = vmatpush2.msra.mxu0 0.0
    %433 = vmatprep.subr.mxu0 0.0
    %434 = vmatpush2.msra.mxu0 0.0
    %435 = vmatprep.subr.mxu0 0.0
    %436 = vmatpush2.msra.mxu0 0.0
    %437 = vmatprep.subr.mxu0 0.0
    %438 = vmatpush2.msra.mxu0 0.0
    %439 = vmatprep.subr.mxu0 0.0
    %440 = vmatpush2.msra.mxu0 0.0
    %441 = vmatprep.subr.mxu0 0.0
    %442 = vmatpush2.msra.mxu0 0.0
    %443 = vmatprep.subr.mxu0 0.0
    %444 = vmatpush2.msra.mxu0 0.0
    %445 = vmatprep.subr.mxu0 0.0
    %446 = vmatpush2.msra.mxu0 0.0
    %447 = vmatprep.subr.mxu0 0.0
    %448 = vmatpush2.msra.mxu0 0.0
    %449 = vmatprep.subr.mxu0 0.0
    %450 = vmatpush2.msra.mxu0 0.0
    %451 = vmatprep.subr.mxu0 0.0
    %452 = vmatpush2.msra.mxu0 0.0
    %453 = vmatprep.subr.mxu0 0.0
    %454 = vmatpush2.msra.mxu0 0.0
    %455 = vmatprep.subr.mxu0 0.0
    %456 = vmatpush2.msra.mxu0 0.0
    %457 = vmatprep.subr.mxu0 0.0
    %458 = vmatpush2.msra.mxu0 0.0
    %459 = vmatprep.subr.mxu0 0.0
    %460 = vmatpush2.msra.mxu0 0.0
    %461 = vmatprep.mubr.f32.mxu0 0.0
    %462 = vmatmul.mubr.f32.gmra.mxu0 %v386
    %v463 = vpop.f32.mrf.mxu0
    %v464 = vadd.f32 0.0, %v463
    %v465 = vpop.f32.mrf.mxu0
    %466 = vmatprep.mubr.f32.mxu0 0.0
    %467 = vmatmul.mubr.f32.gmra.mxu0 %v389
    %v468 = vpop.f32.mrf.mxu0
    %v469 = vadd.f32 0.0, %v468
    %v470 = vpop.f32.mrf.mxu0
    %471 = vmatprep.mubr.f32.mxu0 0.0
    %472 = vmatmul.mubr.f32.gmra.mxu0 %v392
    %v473 = vpop.f32.mrf.mxu0
    %v474 = vadd.f32 0.0, %v473
    %v475 = vpop.f32.mrf.mxu0
    %476 = vmatprep.mubr.f32.mxu0 0.0
    %477 = vmatmul.mubr.f32.gmra.mxu0 %v395
    %v478 = vpop.f32.mrf.mxu0
    %v479 = vadd.f32 0.0, %v478
    %v480 = vpop.f32.mrf.mxu0
    %481 = vdwg.mxu0
    %v482 = vadd.f32 %v372, %v464
    %v483 = vadd.f32 %v373, %v469
    %v484 = vadd.f32 %v374, %v474
    %v485 = vadd.f32 %v375, %v479
    %v486 = vld [vmem:[#allocation2 + $0x4] sm:$0xff]
    %v487 = vld [vmem:[#allocation2 + $0xc] sm:$0xff]
    %v488 = vld [vmem:[#allocation2 + $0x1c] sm:$0xff]
    %v489 = vld [vmem:[#allocation2 + $0x24] sm:$0xff]
    %s490 = scalar_lea.vmem %s0, 128
    %v491 = vld [vmem:[%s490] sm:$0xff]
    %v492 = vld [vmem:[%s490 + $0x8] sm:$0xff]
    %v493 = vld [vmem:[%s490 + $0x10] sm:$0xff]
    %v494 = vld [vmem:[%s490 + $0x18] sm:$0xff]
    %v496 = vsel %vm71, %v486, 0
    %v499 = vsel %vm71, %v487, 0
    %v502 = vsel %vm71, %v488, 0
    %v505 = vsel %vm71, %v489, 0
    %507 = vmatprep.subr.mxu0 0.0
    %508 = vmatpush1.msra.mxu0 0.0
    %509 = vmatprep.subr.mxu0 0.0
    %510 = vmatpush1.msra.mxu0 0.0
    %511 = vmatprep.subr.mxu0 0.0
    %512 = vmatpush1.msra.mxu0 0.0
    %513 = vmatprep.subr.mxu0 0.0
    %514 = vmatpush1.msra.mxu0 0.0
    %515 = vmatprep.subr.mxu0 0.0
    %516 = vmatpush1.msra.mxu0 0.0
    %517 = vmatprep.subr.mxu0 0.0
    %518 = vmatpush1.msra.mxu0 0.0
    %519 = vmatprep.subr.mxu0 0.0
    %520 = vmatpush1.msra.mxu0 0.0
    %521 = vmatprep.subr.mxu0 0.0
    %522 = vmatpush1.msra.mxu0 0.0
    %523 = vmatprep.subr.mxu0 0.0
    %524 = vmatpush1.msra.mxu0 0.0
    %525 = vmatprep.subr.mxu0 0.0
    %526 = vmatpush1.msra.mxu0 0.0
    %527 = vmatprep.subr.mxu0 0.0
    %528 = vmatpush1.msra.mxu0 0.0
    %529 = vmatprep.subr.mxu0 0.0
    %530 = vmatpush1.msra.mxu0 0.0
    %531 = vmatprep.subr.mxu0 0.0
    %532 = vmatpush1.msra.mxu0 %v494
    %533 = vmatprep.subr.mxu0 0.0
    %534 = vmatpush1.msra.mxu0 %v493
    %535 = vmatprep.subr.mxu0 0.0
    %536 = vmatpush1.msra.mxu0 %v492
    %537 = vmatprep.subr.mxu0 0.0
    %538 = vmatpush1.msra.mxu0 %v491
    %539 = vmatprep.subr.mxu0 0.0
    %540 = vmatpush2.msra.mxu0 0.0
    %541 = vmatprep.subr.mxu0 0.0
    %542 = vmatpush2.msra.mxu0 0.0
    %543 = vmatprep.subr.mxu0 0.0
    %544 = vmatpush2.msra.mxu0 0.0
    %545 = vmatprep.subr.mxu0 0.0
    %546 = vmatpush2.msra.mxu0 0.0
    %547 = vmatprep.subr.mxu0 0.0
    %548 = vmatpush2.msra.mxu0 0.0
    %549 = vmatprep.subr.mxu0 0.0
    %550 = vmatpush2.msra.mxu0 0.0
    %551 = vmatprep.subr.mxu0 0.0
    %552 = vmatpush2.msra.mxu0 0.0
    %553 = vmatprep.subr.mxu0 0.0
    %554 = vmatpush2.msra.mxu0 0.0
    %555 = vmatprep.subr.mxu0 0.0
    %556 = vmatpush2.msra.mxu0 0.0
    %557 = vmatprep.subr.mxu0 0.0
    %558 = vmatpush2.msra.mxu0 0.0
    %559 = vmatprep.subr.mxu0 0.0
    %560 = vmatpush2.msra.mxu0 0.0
    %561 = vmatprep.subr.mxu0 0.0
    %562 = vmatpush2.msra.mxu0 0.0
    %563 = vmatprep.subr.mxu0 0.0
    %564 = vmatpush2.msra.mxu0 0.0
    %565 = vmatprep.subr.mxu0 0.0
    %566 = vmatpush2.msra.mxu0 0.0
    %567 = vmatprep.subr.mxu0 0.0
    %568 = vmatpush2.msra.mxu0 0.0
    %569 = vmatprep.subr.mxu0 0.0
    %570 = vmatpush2.msra.mxu0 0.0
    %571 = vmatprep.mubr.f32.mxu0 0.0
    %572 = vmatmul.mubr.f32.gmra.mxu0 %v496
    %v573 = vpop.f32.mrf.mxu0
    %v574 = vadd.f32 0.0, %v573
    %v575 = vpop.f32.mrf.mxu0
    %576 = vmatprep.mubr.f32.mxu0 0.0
    %577 = vmatmul.mubr.f32.gmra.mxu0 %v499
    %v578 = vpop.f32.mrf.mxu0
    %v579 = vadd.f32 0.0, %v578
    %v580 = vpop.f32.mrf.mxu0
    %581 = vmatprep.mubr.f32.mxu0 0.0
    %582 = vmatmul.mubr.f32.gmra.mxu0 %v502
    %v583 = vpop.f32.mrf.mxu0
    %v584 = vadd.f32 0.0, %v583
    %v585 = vpop.f32.mrf.mxu0
    %586 = vmatprep.mubr.f32.mxu0 0.0
    %587 = vmatmul.mubr.f32.gmra.mxu0 %v505
    %v588 = vpop.f32.mrf.mxu0
    %v589 = vadd.f32 0.0, %v588
    %v590 = vpop.f32.mrf.mxu0
    %591 = vdwg.mxu0
    %v592 = vadd.f32 %v482, %v574
    %v593 = vadd.f32 %v483, %v579
    %v594 = vadd.f32 %v484, %v584
    %v595 = vadd.f32 %v485, %v589
    %v596 = vld [vmem:[#allocation2 + $0x5] sm:$0xff]
    %v597 = vld [vmem:[#allocation2 + $0xd] sm:$0xff]
    %v598 = vld [vmem:[#allocation2 + $0x1d] sm:$0xff]
    %v599 = vld [vmem:[#allocation2 + $0x25] sm:$0xff]
    %s600 = scalar_lea.vmem %s0, 160
    %v601 = vld [vmem:[%s600] sm:$0xff]
    %v602 = vld [vmem:[%s600 + $0x8] sm:$0xff]
    %v603 = vld [vmem:[%s600 + $0x10] sm:$0xff]
    %v604 = vld [vmem:[%s600 + $0x18] sm:$0xff]
    %v606 = vsel %vm71, %v596, 0
    %v609 = vsel %vm71, %v597, 0
    %v612 = vsel %vm71, %v598, 0
    %v615 = vsel %vm71, %v599, 0
    %617 = vmatprep.subr.mxu0 0.0
    %618 = vmatpush1.msra.mxu0 0.0
    %619 = vmatprep.subr.mxu0 0.0
    %620 = vmatpush1.msra.mxu0 0.0
    %621 = vmatprep.subr.mxu0 0.0
    %622 = vmatpush1.msra.mxu0 0.0
    %623 = vmatprep.subr.mxu0 0.0
    %624 = vmatpush1.msra.mxu0 0.0
    %625 = vmatprep.subr.mxu0 0.0
    %626 = vmatpush1.msra.mxu0 0.0
    %627 = vmatprep.subr.mxu0 0.0
    %628 = vmatpush1.msra.mxu0 0.0
    %629 = vmatprep.subr.mxu0 0.0
    %630 = vmatpush1.msra.mxu0 0.0
    %631 = vmatprep.subr.mxu0 0.0
    %632 = vmatpush1.msra.mxu0 0.0
    %633 = vmatprep.subr.mxu0 0.0
    %634 = vmatpush1.msra.mxu0 0.0
    %635 = vmatprep.subr.mxu0 0.0
    %636 = vmatpush1.msra.mxu0 0.0
    %637 = vmatprep.subr.mxu0 0.0
    %638 = vmatpush1.msra.mxu0 0.0
    %639 = vmatprep.subr.mxu0 0.0
    %640 = vmatpush1.msra.mxu0 0.0
    %641 = vmatprep.subr.mxu0 0.0
    %642 = vmatpush1.msra.mxu0 %v604
    %643 = vmatprep.subr.mxu0 0.0
    %644 = vmatpush1.msra.mxu0 %v603
    %645 = vmatprep.subr.mxu0 0.0
    %646 = vmatpush1.msra.mxu0 %v602
    %647 = vmatprep.subr.mxu0 0.0
    %648 = vmatpush1.msra.mxu0 %v601
    %649 = vmatprep.subr.mxu0 0.0
    %650 = vmatpush2.msra.mxu0 0.0
    %651 = vmatprep.subr.mxu0 0.0
    %652 = vmatpush2.msra.mxu0 0.0
    %653 = vmatprep.subr.mxu0 0.0
    %654 = vmatpush2.msra.mxu0 0.0
    %655 = vmatprep.subr.mxu0 0.0
    %656 = vmatpush2.msra.mxu0 0.0
    %657 = vmatprep.subr.mxu0 0.0
    %658 = vmatpush2.msra.mxu0 0.0
    %659 = vmatprep.subr.mxu0 0.0
    %660 = vmatpush2.msra.mxu0 0.0
    %661 = vmatprep.subr.mxu0 0.0
    %662 = vmatpush2.msra.mxu0 0.0
    %663 = vmatprep.subr.mxu0 0.0
    %664 = vmatpush2.msra.mxu0 0.0
    %665 = vmatprep.subr.mxu0 0.0
    %666 = vmatpush2.msra.mxu0 0.0
    %667 = vmatprep.subr.mxu0 0.0
    %668 = vmatpush2.msra.mxu0 0.0
    %669 = vmatprep.subr.mxu0 0.0
    %670 = vmatpush2.msra.mxu0 0.0
    %671 = vmatprep.subr.mxu0 0.0
    %672 = vmatpush2.msra.mxu0 0.0
    %673 = vmatprep.subr.mxu0 0.0
    %674 = vmatpush2.msra.mxu0 0.0
    %675 = vmatprep.subr.mxu0 0.0
    %676 = vmatpush2.msra.mxu0 0.0
    %677 = vmatprep.subr.mxu0 0.0
    %678 = vmatpush2.msra.mxu0 0.0
    %679 = vmatprep.subr.mxu0 0.0
    %680 = vmatpush2.msra.mxu0 0.0
    %681 = vmatprep.mubr.f32.mxu0 0.0
    %682 = vmatmul.mubr.f32.gmra.mxu0 %v606
    %v683 = vpop.f32.mrf.mxu0
    %v684 = vadd.f32 0.0, %v683
    %v685 = vpop.f32.mrf.mxu0
    %686 = vmatprep.mubr.f32.mxu0 0.0
    %687 = vmatmul.mubr.f32.gmra.mxu0 %v609
    %v688 = vpop.f32.mrf.mxu0
    %v689 = vadd.f32 0.0, %v688
    %v690 = vpop.f32.mrf.mxu0
    %691 = vmatprep.mubr.f32.mxu0 0.0
    %692 = vmatmul.mubr.f32.gmra.mxu0 %v612
    %v693 = vpop.f32.mrf.mxu0
    %v694 = vadd.f32 0.0, %v693
    %v695 = vpop.f32.mrf.mxu0
    %696 = vmatprep.mubr.f32.mxu0 0.0
    %697 = vmatmul.mubr.f32.gmra.mxu0 %v615
    %v698 = vpop.f32.mrf.mxu0
    %v699 = vadd.f32 0.0, %v698
    %v700 = vpop.f32.mrf.mxu0
    %701 = vdwg.mxu0
    %v702 = vadd.f32 %v592, %v684
    %v703 = vadd.f32 %v593, %v689
    %v704 = vadd.f32 %v594, %v694
    %v705 = vadd.f32 %v595, %v699
    %v706 = vld [vmem:[#allocation2 + $0x6] sm:$0xff]
    %v707 = vld [vmem:[#allocation2 + $0xe] sm:$0xff]
    %v708 = vld [vmem:[#allocation2 + $0x1e] sm:$0xff]
    %v709 = vld [vmem:[#allocation2 + $0x26] sm:$0xff]
    %s710 = scalar_lea.vmem %s0, 192
    %v711 = vld [vmem:[%s710] sm:$0xff]
    %v712 = vld [vmem:[%s710 + $0x8] sm:$0xff]
    %v713 = vld [vmem:[%s710 + $0x10] sm:$0xff]
    %v714 = vld [vmem:[%s710 + $0x18] sm:$0xff]
    %v716 = vsel %vm71, %v706, 0
    %v719 = vsel %vm71, %v707, 0
    %v722 = vsel %vm71, %v708, 0
    %v725 = vsel %vm71, %v709, 0
    %727 = vmatprep.subr.mxu0 0.0
    %728 = vmatpush1.msra.mxu0 0.0
    %729 = vmatprep.subr.mxu0 0.0
    %730 = vmatpush1.msra.mxu0 0.0
    %731 = vmatprep.subr.mxu0 0.0
    %732 = vmatpush1.msra.mxu0 0.0
    %733 = vmatprep.subr.mxu0 0.0
    %734 = vmatpush1.msra.mxu0 0.0
    %735 = vmatprep.subr.mxu0 0.0
    %736 = vmatpush1.msra.mxu0 0.0
    %737 = vmatprep.subr.mxu0 0.0
    %738 = vmatpush1.msra.mxu0 0.0
    %739 = vmatprep.subr.mxu0 0.0
    %740 = vmatpush1.msra.mxu0 0.0
    %741 = vmatprep.subr.mxu0 0.0
    %742 = vmatpush1.msra.mxu0 0.0
    %743 = vmatprep.subr.mxu0 0.0
    %744 = vmatpush1.msra.mxu0 0.0
    %745 = vmatprep.subr.mxu0 0.0
    %746 = vmatpush1.msra.mxu0 0.0
    %747 = vmatprep.subr.mxu0 0.0
    %748 = vmatpush1.msra.mxu0 0.0
    %749 = vmatprep.subr.mxu0 0.0
    %750 = vmatpush1.msra.mxu0 0.0
    %751 = vmatprep.subr.mxu0 0.0
    %752 = vmatpush1.msra.mxu0 %v714
    %753 = vmatprep.subr.mxu0 0.0
    %754 = vmatpush1.msra.mxu0 %v713
    %755 = vmatprep.subr.mxu0 0.0
    %756 = vmatpush1.msra.mxu0 %v712
    %757 = vmatprep.subr.mxu0 0.0
    %758 = vmatpush1.msra.mxu0 %v711
    %759 = vmatprep.subr.mxu0 0.0
    %760 = vmatpush2.msra.mxu0 0.0
    %761 = vmatprep.subr.mxu0 0.0
    %762 = vmatpush2.msra.mxu0 0.0
    %763 = vmatprep.subr.mxu0 0.0
    %764 = vmatpush2.msra.mxu0 0.0
    %765 = vmatprep.subr.mxu0 0.0
    %766 = vmatpush2.msra.mxu0 0.0
    %767 = vmatprep.subr.mxu0 0.0
    %768 = vmatpush2.msra.mxu0 0.0
    %769 = vmatprep.subr.mxu0 0.0
    %770 = vmatpush2.msra.mxu0 0.0
    %771 = vmatprep.subr.mxu0 0.0
    %772 = vmatpush2.msra.mxu0 0.0
    %773 = vmatprep.subr.mxu0 0.0
    %774 = vmatpush2.msra.mxu0 0.0
    %775 = vmatprep.subr.mxu0 0.0
    %776 = vmatpush2.msra.mxu0 0.0
    %777 = vmatprep.subr.mxu0 0.0
    %778 = vmatpush2.msra.mxu0 0.0
    %779 = vmatprep.subr.mxu0 0.0
    %780 = vmatpush2.msra.mxu0 0.0
    %781 = vmatprep.subr.mxu0 0.0
    %782 = vmatpush2.msra.mxu0 0.0
    %783 = vmatprep.subr.mxu0 0.0
    %784 = vmatpush2.msra.mxu0 0.0
    %785 = vmatprep.subr.mxu0 0.0
    %786 = vmatpush2.msra.mxu0 0.0
    %787 = vmatprep.subr.mxu0 0.0
    %788 = vmatpush2.msra.mxu0 0.0
    %789 = vmatprep.subr.mxu0 0.0
    %790 = vmatpush2.msra.mxu0 0.0
    %791 = vmatprep.mubr.f32.mxu0 0.0
    %792 = vmatmul.mubr.f32.gmra.mxu0 %v716
    %v793 = vpop.f32.mrf.mxu0
    %v794 = vadd.f32 0.0, %v793
    %v795 = vpop.f32.mrf.mxu0
    %796 = vmatprep.mubr.f32.mxu0 0.0
    %797 = vmatmul.mubr.f32.gmra.mxu0 %v719
    %v798 = vpop.f32.mrf.mxu0
    %v799 = vadd.f32 0.0, %v798
    %v800 = vpop.f32.mrf.mxu0
    %801 = vmatprep.mubr.f32.mxu0 0.0
    %802 = vmatmul.mubr.f32.gmra.mxu0 %v722
    %v803 = vpop.f32.mrf.mxu0
    %v804 = vadd.f32 0.0, %v803
    %v805 = vpop.f32.mrf.mxu0
    %806 = vmatprep.mubr.f32.mxu0 0.0
    %807 = vmatmul.mubr.f32.gmra.mxu0 %v725
    %v808 = vpop.f32.mrf.mxu0
    %v809 = vadd.f32 0.0, %v808
    %v810 = vpop.f32.mrf.mxu0
    %811 = vdwg.mxu0
    %v812 = vadd.f32 %v702, %v794
    %v813 = vadd.f32 %v703, %v799
    %v814 = vadd.f32 %v704, %v804
    %v815 = vadd.f32 %v705, %v809
    %v816 = vxor.u32 %v812, 2147483648
    %v817 = vxor.u32 %v813, 2147483648
    %v818 = vxor.u32 %v814, 2147483648
    %v819 = vxor.u32 %v815, 2147483648
    %v820 = vmul.f32 %v816, 1.442695
    %v821 = vpow.pop %v820
    %v822 = vmul.f32 %v817, 1.442695
    %v823 = vpow.pop %v822
    %v824 = vmul.f32 %v818, 1.442695
    %v825 = vpow.pop %v824
    %v826 = vmul.f32 %v819, 1.442695
    %v827 = vpow.pop %v826
    %v828 = vadd.f32 %v821, 1.0
    %v829 = vadd.f32 %v823, 1.0
    %v830 = vadd.f32 %v825, 1.0
    %v831 = vadd.f32 %v827, 1.0
    %v832 = vrcp.pop %v828
    %v833 = vmul.f32 1.0, %v832
    %v834 = vrcp.pop %v829
    %v835 = vmul.f32 1.0, %v834
    %v836 = vrcp.pop %v830
    %v837 = vmul.f32 1.0, %v836
    %v838 = vrcp.pop %v831
    %v839 = vmul.f32 1.0, %v838
    %840 = vst.msk [vmem:[#allocation3] sm:$0xff] %vm24, %v833
    %841 = vst.msk [vmem:[#allocation3 + $0x8] sm:$0xff] %vm24, %v835
    %842 = vst.msk [vmem:[#allocation3 + $0x10] sm:$0xff] %vm24, %v837
    %843 = vst.msk [vmem:[#allocation3 + $0x18] sm:$0xff] %vm24, %v839
    // Predicated region
    $region14: #{spatial_attention.3} parent=1 // pred_check
      _
    $region15: #{spatial_attention.3} parent=1 // pred_check_branch
      %845 = sbr.rel (0) target = $region17
    $region16: #{spatial_attention.3} parent=1 // pred_region
      %s847 = ssub.s32 512, 512
      %848 = vsyncadd [#allocation4], %s847
      %s849 = sshll.u32 [#allocation3], 4
      %s850 = int_to_ptr.vmem [resolvable:$true] %s849
      %855 = dma.vmem_to_hbm [thread:$0]  %s850, 512, %s3, [#allocation4], 128, 128, 8
    $region17: #{spatial_attention.3} parent=1 // pred_fallthru
      _
    // Predicated region
    $region18: #{spatial_attention.3} parent=1 // pred_check
      _
    $region19: #{spatial_attention.3} parent=1 // pred_check_branch
      %857 = sbr.rel (0) target = $region21
    $region20: #{spatial_attention.3} parent=1 // pred_region
      %858 = dma.done [#allocation4], 512
    $region21: #{spatial_attention.3} parent=1 // pred_fallthru
      _
    %859 = vsyncpa [#allocation4], 1

</llo_original>
